<compile_context>
chip_gen: v7x
topology: tpu7x:2x2x1
jax: 0.10.0
libtpu: 0.0.40
codegen_flags: <defaults>
</compile_context>

<pallas_src>
import math

import jax
import jax.numpy as jnp
from jax import lax
from jax.experimental import pallas as pl
from jax.experimental.pallas import tpu as pltpu


# ---------------------------------------------------------------------------
# Pallas kernel: block-sparse scatter-max of BEV features into RV pixels
# ---------------------------------------------------------------------------
def _scatter_max_kernel(sblk_ref, ntl_ref, idx_ref, feat_ref, out_ref):
    """One grid step of the bucketed masked scatter-max reduction.

    sblk_ref : (B*n_m_tiles,) int32 SMEM  start BEV block per (b, m) bucket
                                          (consumed by the index_maps only)
    ntl_ref  : (B*n_m_tiles,) int32 SMEM  number of BEV blocks per (b, m) bucket
    idx_ref  : (1, TN, 1)  int32  flat RV target index per BEV pixel
                                  (sentinel Mp for padded pixels), pixels on sublanes
    feat_ref : (1, TN, Cp) float32 BEV features, pixels on sublanes / channels on lanes
    out_ref  : (1, Cp, TM) float32 RV tile accumulator (resident across the BEV
                                  grid axis), lane-dense on the RV pixel axis
    """
    del sblk_ref  # only used by the data-dependent index_maps
    b = pl.program_id(0)
    mt = pl.program_id(1)
    n = pl.program_id(2)
    num_m = pl.num_programs(1)
    neg_inf = jnp.float32(-jnp.inf)

    num_ch = out_ref.shape[1]          # Cp, a multiple of 8
    tile_m = out_ref.shape[2]

    @pl.when(n == 0)
    def _():
        out_ref[...] = jnp.full(out_ref.shape, neg_inf, out_ref.dtype)

    # Skip grid steps past this bucket's end (block-sparse skip).  Correctness
    # does not depend on the guard: out-of-bucket pixels never match the mask.
    @pl.when(n < ntl_ref[b * num_m + mt])
    def _():
        idx_col = idx_ref[0]                                     # (TN, 1) int32
        feat2d = feat_ref[0]                                     # (TN, Cp) f32
        # (1, TM) lane iota compare: no materialized (TN, TM) iota.
        lane_ids = lax.broadcasted_iota(jnp.int32, (1, tile_m), 1)
        mask = (idx_col - mt * tile_m) == lane_ids               # (TN, TM)
        sub_row = lax.broadcasted_iota(jnp.int32, (8, 1), 0)     # (8, 1)

        # Channels in blocks of 8 sublane rows: one (8, TM) load and one
        # unmasked (8, TM) store per block (no single-row masked RMW).
        # TODO(synk): switch to fori_loop / channel grid axis for C >~ 256.
        for cb in range(num_ch // 8):
            c0 = cb * 8
            acc = out_ref[0, c0:c0 + 8, :]                       # (8, TM) load once
            for j in range(8):
                contrib = jnp.max(
                    jnp.where(mask, feat2d[:, c0 + j:c0 + j + 1], neg_inf),
                    axis=0, keepdims=True)                       # (1, TM) sublane reduce
                # Place the contribution on sublane row j, then running max.
                acc = jnp.maximum(acc, jnp.where(sub_row == j, contrib, neg_inf))
            out_ref[0, c0:c0 + 8, :] = acc                       # store once

    @pl.when(n == pl.num_programs(2) - 1)
    def _():
        # RV cells that received no BEV pixel -> 0 (torch_scatter 'max' fill).
        # Note: a legitimate input feature equal to -inf is also mapped to 0.
        o = out_ref[...]
        out_ref[...] = jnp.where(o == neg_inf, jnp.float32(0.0), o)


# ---------------------------------------------------------------------------
# Glue: BEV pixel -> RV pixel index computation (elementwise, plain JAX).
# atan2 has no guaranteed Mosaic lowering, so this stays outside the kernel.
# ---------------------------------------------------------------------------
def _bev_to_rv_indices(bev_z_bin, *, bev_size, rv_size,
                       z_range=(-4.0, 2.0), z_bins=30,
                       fov_phi=(math.radians(-180.0), math.radians(180.0)),
                       fov_theta=(math.radians(-25.0), math.radians(3.0)),
                       range_xy=(-50.0, 50.0, -50.0, 50.0)):
    H_b, W_b = bev_size
    H_r, W_r = rv_size
    z_min, z_max = z_range
    phi_min, phi_max = fov_phi
    theta_min, theta_max = fov_theta
    xmin, xmax, ymin, ymax = range_xy

    y_lin = jnp.linspace(ymax, ymin, H_b, dtype=jnp.float32)
    x_lin = jnp.linspace(xmin, xmax, W_b, dtype=jnp.float32)
    yg, xg = jnp.meshgrid(y_lin, x_lin, indexing="ij")                   # torch meshgrid 'ij'
    phi = jnp.arctan2(yg, xg)
    col = jnp.clip(jnp.round((phi - phi_min) / (phi_max - phi_min) * (W_r - 1)),
                   0, W_r - 1).astype(jnp.int32)                         # (H_b, W_b)
    rho = jnp.sqrt(xg * xg + yg * yg) + 1e-6

    dz = (z_max - z_min) / z_bins
    z_rel = bev_z_bin[:, 0].astype(jnp.float32) * dz + (z_min + dz / 2)  # (B, H_b, W_b)
    theta = jnp.arctan2(z_rel, rho[None])                                # finite for finite inputs
    row = jnp.clip(jnp.round((theta_max - theta) / (theta_max - theta_min) * (H_r - 1)),
                   0, H_r - 1).astype(jnp.int32)                         # (B, H_b, W_b)
    # TODO(synk): the reference's `valid = isfinite(theta)` mask is always
    # all-True for finite inputs, so it is not materialized here.
    return row * W_r + col[None]                                         # (B, H_b, W_b)


# ---------------------------------------------------------------------------
# Wrapper: BEV2RV forward (bucketing + scalar-prefetch driven pallas_call)
# NOTE: the wrapper computes data-dependent bucket sizes eagerly because the
# inner grid extent must be a static Python int; production code under jit
# would substitute a conservative static bound instead.
# ---------------------------------------------------------------------------
def bev2rv(bev_feat, bev_z_bin, *, bev_size, rv_size, tile_m=512, tile_n=512, **cfg):
    H_b, W_b = bev_size
    H_r, W_r = rv_size
    B, C, _, _ = bev_feat.shape
    N = H_b * W_b
    M = H_r * W_r

    # v7x megacore: keep >= 2 parallel (batch x m-tile) units so neither TC idles.
    while B * pl.cdiv(M, tile_m) < 2 and tile_m > 128:
        tile_m //= 2
    assert tile_m % 128 == 0 and tile_n % 8 == 0

    Cp = pl.cdiv(C, 8) * 8                 # channel blocks of 8 sublane rows
    Np = pl.cdiv(N, tile_n) * tile_n       # pad BEV pixels up to a tile multiple
    Mp = pl.cdiv(M, tile_m) * tile_m       # pad RV pixels up to a tile multiple
    n_m_tiles = Mp // tile_m
    nblk = Np // tile_n
    sentinel = Mp                          # > every RV lane id -> never matches; sorts last

    idx = _bev_to_rv_indices(bev_z_bin, bev_size=bev_size, rv_size=rv_size, **cfg)
    idx = idx.reshape(B, N).astype(jnp.int32)
    # (B, N, C): BEV pixels on sublanes inside the kernel, channels on lanes.
    feat = jnp.transpose(bev_feat.reshape(B, C, N).astype(jnp.float32), (0, 2, 1))

    # ---- bucket BEV pixels by destination m-tile (block-sparse reduction) ----
    order = jnp.argsort(idx, axis=1)
    idx_s = jnp.take_along_axis(idx, order, axis=1)                      # (B, N) sorted
    feat_s = jnp.take_along_axis(feat, order[:, :, None], axis=1)        # (B, N, C)
    if Np != N:
        idx_s = jnp.pad(idx_s, ((0, 0), (0, Np - N)), constant_values=sentinel)
        feat_s = jnp.pad(feat_s, ((0, 0), (0, Np - N), (0, 0)))
    if Cp != C:
        feat_s = jnp.pad(feat_s, ((0, 0), (0, 0), (0, Cp - C)))
    idx_in = idx_s.reshape(B, Np, 1)

    bounds = jnp.arange(n_m_tiles + 1, dtype=jnp.int32) * tile_m
    pos = jax.vmap(lambda s: jnp.searchsorted(s, bounds, side="left"))(idx_s)
    pos = pos.astype(jnp.int32)                                          # (B, n_m_tiles+1)
    start, end = pos[:, :-1], pos[:, 1:]
    start_blk = start // tile_n
    end_blk = (end + tile_n - 1) // tile_n
    ntiles = jnp.where(end > start, end_blk - start_blk, 0).astype(jnp.int32)

    # Inner (reduction) grid extent = max bucket length in BEV blocks (>=1 so
    # init/finalize always run).  Concrete value -> static grid.
    n_inner = max(int(jnp.max(ntiles)), 1)

    sblk = start_blk.reshape(-1).astype(jnp.int32)       # (B*n_m_tiles,) SMEM
    ntl = ntiles.reshape(-1)                             # (B*n_m_tiles,) SMEM

    def bev_blk(b, mt, n, sblk_ref, ntl_ref):
        # Data-dependent block index; clamp keeps skipped steps' DMAs in bounds.
        blk = jnp.minimum(sblk_ref[b * n_m_tiles + mt] + n, nblk - 1)
        return (b, blk, 0)

    grid = (B, n_m_tiles, n_inner)
    cost = pl.CostEstimate(
        flops=2 * B * n_m_tiles * n_inner * Cp * tile_n * tile_m,
        transcendentals=0,
        bytes_accessed=B * n_m_tiles * n_inner * tile_n * 4 * (1 + Cp) + B * Cp * Mp * 4)

    rv_flat = pl.pallas_call(
        _scatter_max_kernel,
        out_shape=jax.ShapeDtypeStruct((B, Cp, Mp), jnp.float32),
        grid_spec=pltpu.PrefetchScalarGridSpec(
            num_scalar_prefetch=2,
            grid=grid,
            in_specs=[
                pl.BlockSpec((1, tile_n, 1), bev_blk),
                pl.BlockSpec((1, tile_n, Cp), bev_blk),
            ],
            out_specs=pl.BlockSpec((1, Cp, tile_m),
                                   lambda b, mt, n, sblk_ref, ntl_ref: (b, 0, mt)),
        ),
        compiler_params=pltpu.CompilerParams(
            dimension_semantics=("parallel", "parallel", "arbitrary"),
            vmem_limit_bytes=32 * 1024 * 1024),
        cost_estimate=cost,
    )(sblk, ntl, idx_in, feat_s)

    return rv_flat[:, :C, :M].reshape(B, C, H_r, W_r)


# ---------------------------------------------------------------------------
# Pure-JAX reference (segment max; empty RV cells -> 0)
# ---------------------------------------------------------------------------
def bev2rv_reference(bev_feat, bev_z_bin, *, bev_size, rv_size, **cfg):
    H_r, W_r = rv_size
    B, C, H_b, W_b = bev_feat.shape
    N, M = H_b * W_b, H_r * W_r
    idx = _bev_to_rv_indices(bev_z_bin, bev_size=bev_size, rv_size=rv_size, **cfg)
    idx = idx.reshape(B, N)
    feat = bev_feat.reshape(B, C, N).astype(jnp.float32)

    def one(f, i):                                        # f (C, N), i (N,)
        out = jax.ops.segment_max(f.T, i, num_segments=M)   # (M, C), empty -> -inf
        out = jnp.where(jnp.isneginf(out), 0.0, out)
        return out.T.reshape(C, H_r, W_r)

    return jax.vmap(one)(feat, idx)


if __name__ == "__main__":
    B, C = 2, 4
    bev_size = (12, 16)   # H_b, W_b -> N = 192 (exercises sentinel BEV padding)
    rv_size = (8, 56)     # H_r, W_r -> M = 448 (exercises RV lane padding)

    key = jax.random.PRNGKey(0)
    k_feat, k_zbin = jax.random.split(key)
    bev_feat = jax.random.normal(k_feat, (B, C) + bev_size, dtype=jnp.float32)
    bev_z_bin = jax.random.randint(k_zbin, (B, 1) + bev_size, 0, 30, dtype=jnp.int32)

    # Small tiles so the demo exercises multiple m-tiles, multiple BEV blocks,
    # channel padding (4 -> 8) and the bucketed data-dependent index_map.
    rv = bev2rv(bev_feat, bev_z_bin, bev_size=bev_size, rv_size=rv_size,
                tile_m=256, tile_n=128)
    rv = jax.block_until_ready(rv)

    ref = bev2rv_reference(bev_feat, bev_z_bin, bev_size=bev_size, rv_size=rv_size)
    ref = jax.block_until_ready(ref)

    assert rv.shape == (B, C) + rv_size, rv.shape
    assert jnp.allclose(rv, ref, atol=1e-5), float(jnp.max(jnp.abs(rv - ref)))
    print("KERNEL_OK")
</pallas_src>

<mosaic_0001>
module attributes {stable_mosaic.version = 11 : i64} {
  func.func @_scatter_max_kernel(%arg0: i32, %arg1: i32, %arg2: i32, %arg3: memref<4xi32, #tpu.memory_space<smem>>, %arg4: memref<4xi32, #tpu.memory_space<smem>>, %arg5: memref<1x128x1xi32, #tpu.memory_space<vmem>>, %arg6: memref<1x128x8xf32, #tpu.memory_space<vmem>>, %arg7: memref<1x8x256xf32, #tpu.memory_space<vmem>>) attributes {dimension_semantics = [#tpu.dimension_semantics<parallel>, #tpu.dimension_semantics<parallel>, #tpu.dimension_semantics<arbitrary>], iteration_bounds = array<i64: 2, 2, 2>, scalar_prefetch = 2 : i64, scratch_operands = 0 : i64, tpu.core_type = #tpu.core_type<tc>, window_params = [{transform_indices = @transform_0, window_bounds = array<i64: 1, 128, 1>}, {transform_indices = @transform_1, window_bounds = array<i64: 1, 128, 8>}, {transform_indices = @transform_2, window_bounds = array<i64: 1, 8, 256>}]} {
    %c0_i32 = arith.constant 0 : i32
    %0 = arith.cmpi eq, %arg2, %c0_i32 : i32
    %1 = arith.extui %0 : i1 to i32
    %cst = arith.constant 0xFF800000 : f32
    %c0_i32_0 = arith.constant 0 : i32
    %2 = arith.cmpi ne, %1, %c0_i32_0 : i32
    scf.if %2 {
      %13 = vector.broadcast %cst : f32 to vector<1x8x256xf32>
      %c0 = arith.constant 0 : index
      %c0_5 = arith.constant 0 : index
      %c0_6 = arith.constant 0 : index
      %14 = vector.load %arg7[%c0, %c0_5, %c0_6] : memref<1x8x256xf32, #tpu.memory_space<vmem>>, vector<1x8x256xf32>
      tpu.vector_store %arg7[%c0, %c0_5, %c0_6], %13 {strides = array<i32>} : memref<1x8x256xf32, #tpu.memory_space<vmem>>, vector<1x8x256xf32>,
    } else {
    }
    %c2_i32 = arith.constant 2 : i32
    %3 = arith.muli %arg0, %c2_i32 : i32
    %4 = arith.addi %3, %arg1 : i32
    %5 = arith.index_cast %4 : i32 to index
    %6 = memref.load %arg4[%5] : memref<4xi32, #tpu.memory_space<smem>>
    %7 = arith.cmpi slt, %arg2, %6 : i32
    %8 = arith.extui %7 : i1 to i32
    %cst_1 = arith.constant 0xFF800000 : f32
    %c0_i32_2 = arith.constant 0 : i32
    %9 = arith.cmpi ne, %8, %c0_i32_2 : i32
    scf.if %9 {
      %c0 = arith.constant 0 : index
      %c0_5 = arith.constant 0 : index
      %c0_6 = arith.constant 0 : index
      %13 = vector.load %arg5[%c0, %c0_5, %c0_6] : memref<1x128x1xi32, #tpu.memory_space<vmem>>, vector<1x128x1xi32>
      %14 = vector.shape_cast %13 : vector<1x128x1xi32> to vector<128x1xi32>
      %c0_7 = arith.constant 0 : index
      %c0_8 = arith.constant 0 : index
      %c0_9 = arith.constant 0 : index
      %15 = vector.load %arg6[%c0_7, %c0_8, %c0_9] : memref<1x128x8xf32, #tpu.memory_space<vmem>>, vector<1x128x8xf32>
      %16 = vector.shape_cast %15 : vector<1x128x8xf32> to vector<128x8xf32>
      %17 = tpu.iota {dimensions = array<i32: 1>} : vector<1x256xi32>
      %c256_i32 = arith.constant 256 : i32
      %18 = arith.muli %arg1, %c256_i32 : i32
      %19 = vector.broadcast %18 : i32 to vector<128x1xi32>
      %20 = arith.subi %14, %19 : vector<128x1xi32>
      %21 = vector.broadcast %20 : vector<128x1xi32> to vector<128x256xi32>
      %22 = vector.broadcast %17 : vector<1x256xi32> to vector<128x256xi32>
      %23 = arith.cmpi eq, %21, %22 : vector<128x256xi32>
      %24 = tpu.iota {dimensions = array<i32: 0>} : vector<8x1xi32>
      %c0_10 = arith.constant 0 : index
      %c0_11 = arith.constant 0 : index
      %c0_12 = arith.constant 0 : index
      %25 = vector.load %arg7[%c0_10, %c0_11, %c0_12] : memref<1x8x256xf32, #tpu.memory_space<vmem>>, vector<1x8x256xf32>
      %26 = vector.shape_cast %25 : vector<1x8x256xf32> to vector<8x256xf32>
      %27 = vector.extract_strided_slice %16 {offsets = [0, 0], sizes = [128, 1], strides = [1, 1]} : vector<128x8xf32> to vector<128x1xf32>
      %28 = vector.shape_cast %27 : vector<128x1xf32> to vector<128x1xf32>
      %29 = vector.broadcast %28 : vector<128x1xf32> to vector<128x256xf32>
      %30 = vector.broadcast %cst_1 : f32 to vector<128x256xf32>
      %31 = arith.select %23, %29, %30 : vector<128x256xi1>, vector<128x256xf32>
      %cst_13 = arith.constant dense<0xFF800000> : vector<256xf32>
      %32 = vector.multi_reduction <maximumf>, %31, %cst_13 [0] : vector<128x256xf32> to vector<256xf32>
      %33 = vector.shape_cast %32 : vector<256xf32> to vector<1x256xf32>
      %c0_i32_14 = arith.constant 0 : i32
      %34 = vector.broadcast %c0_i32_14 : i32 to vector<8x1xi32>
      %35 = arith.cmpi eq, %24, %34 : vector<8x1xi32>
      %36 = vector.shape_cast %35 : vector<8x1xi1> to vector<8x1xi1>
      %37 = vector.broadcast %36 : vector<8x1xi1> to vector<8x256xi1>
      %38 = vector.shape_cast %33 : vector<1x256xf32> to vector<1x256xf32>
      %39 = vector.broadcast %38 : vector<1x256xf32> to vector<8x256xf32>
      %40 = vector.broadcast %cst_1 : f32 to vector<8x256xf32>
      %41 = arith.select %37, %39, %40 : vector<8x256xi1>, vector<8x256xf32>
      %42 = arith.maximumf %26, %41 : vector<8x256xf32>
      %43 = vector.extract_strided_slice %16 {offsets = [0, 1], sizes = [128, 1], strides = [1, 1]} : vector<128x8xf32> to vector<128x1xf32>
      %44 = vector.shape_cast %43 : vector<128x1xf32> to vector<128x1xf32>
      %45 = vector.broadcast %44 : vector<128x1xf32> to vector<128x256xf32>
      %46 = vector.broadcast %cst_1 : f32 to vector<128x256xf32>
      %47 = arith.select %23, %45, %46 : vector<128x256xi1>, vector<128x256xf32>
      %cst_15 = arith.constant dense<0xFF800000> : vector<256xf32>
      %48 = vector.multi_reduction <maximumf>, %47, %cst_15 [0] : vector<128x256xf32> to vector<256xf32>
      %49 = vector.shape_cast %48 : vector<256xf32> to vector<1x256xf32>
      %c1_i32_16 = arith.constant 1 : i32
      %50 = vector.broadcast %c1_i32_16 : i32 to vector<8x1xi32>
      %51 = arith.cmpi eq, %24, %50 : vector<8x1xi32>
      %52 = vector.shape_cast %51 : vector<8x1xi1> to vector<8x1xi1>
      %53 = vector.broadcast %52 : vector<8x1xi1> to vector<8x256xi1>
      %54 = vector.shape_cast %49 : vector<1x256xf32> to vector<1x256xf32>
      %55 = vector.broadcast %54 : vector<1x256xf32> to vector<8x256xf32>
      %56 = vector.broadcast %cst_1 : f32 to vector<8x256xf32>
      %57 = arith.select %53, %55, %56 : vector<8x256xi1>, vector<8x256xf32>
      %58 = arith.maximumf %42, %57 : vector<8x256xf32>
      %59 = vector.extract_strided_slice %16 {offsets = [0, 2], sizes = [128, 1], strides = [1, 1]} : vector<128x8xf32> to vector<128x1xf32>
      %60 = vector.shape_cast %59 : vector<128x1xf32> to vector<128x1xf32>
      %61 = vector.broadcast %60 : vector<128x1xf32> to vector<128x256xf32>
      %62 = vector.broadcast %cst_1 : f32 to vector<128x256xf32>
      %63 = arith.select %23, %61, %62 : vector<128x256xi1>, vector<128x256xf32>
      %cst_17 = arith.constant dense<0xFF800000> : vector<256xf32>
      %64 = vector.multi_reduction <maximumf>, %63, %cst_17 [0] : vector<128x256xf32> to vector<256xf32>
      %65 = vector.shape_cast %64 : vector<256xf32> to vector<1x256xf32>
      %c2_i32_18 = arith.constant 2 : i32
      %66 = vector.broadcast %c2_i32_18 : i32 to vector<8x1xi32>
      %67 = arith.cmpi eq, %24, %66 : vector<8x1xi32>
      %68 = vector.shape_cast %67 : vector<8x1xi1> to vector<8x1xi1>
      %69 = vector.broadcast %68 : vector<8x1xi1> to vector<8x256xi1>
      %70 = vector.shape_cast %65 : vector<1x256xf32> to vector<1x256xf32>
      %71 = vector.broadcast %70 : vector<1x256xf32> to vector<8x256xf32>
      %72 = vector.broadcast %cst_1 : f32 to vector<8x256xf32>
      %73 = arith.select %69, %71, %72 : vector<8x256xi1>, vector<8x256xf32>
      %74 = arith.maximumf %58, %73 : vector<8x256xf32>
      %75 = vector.extract_strided_slice %16 {offsets = [0, 3], sizes = [128, 1], strides = [1, 1]} : vector<128x8xf32> to vector<128x1xf32>
      %76 = vector.shape_cast %75 : vector<128x1xf32> to vector<128x1xf32>
      %77 = vector.broadcast %76 : vector<128x1xf32> to vector<128x256xf32>
      %78 = vector.broadcast %cst_1 : f32 to vector<128x256xf32>
      %79 = arith.select %23, %77, %78 : vector<128x256xi1>, vector<128x256xf32>
      %cst_19 = arith.constant dense<0xFF800000> : vector<256xf32>
      %80 = vector.multi_reduction <maximumf>, %79, %cst_19 [0] : vector<128x256xf32> to vector<256xf32>
      %81 = vector.shape_cast %80 : vector<256xf32> to vector<1x256xf32>
      %c3_i32 = arith.constant 3 : i32
      %82 = vector.broadcast %c3_i32 : i32 to vector<8x1xi32>
      %83 = arith.cmpi eq, %24, %82 : vector<8x1xi32>
      %84 = vector.shape_cast %83 : vector<8x1xi1> to vector<8x1xi1>
      %85 = vector.broadcast %84 : vector<8x1xi1> to vector<8x256xi1>
      %86 = vector.shape_cast %81 : vector<1x256xf32> to vector<1x256xf32>
      %87 = vector.broadcast %86 : vector<1x256xf32> to vector<8x256xf32>
      %88 = vector.broadcast %cst_1 : f32 to vector<8x256xf32>
      %89 = arith.select %85, %87, %88 : vector<8x256xi1>, vector<8x256xf32>
      %90 = arith.maximumf %74, %89 : vector<8x256xf32>
      %91 = vector.extract_strided_slice %16 {offsets = [0, 4], sizes = [128, 1], strides = [1, 1]} : vector<128x8xf32> to vector<128x1xf32>
      %92 = vector.shape_cast %91 : vector<128x1xf32> to vector<128x1xf32>
      %93 = vector.broadcast %92 : vector<128x1xf32> to vector<128x256xf32>
      %94 = vector.broadcast %cst_1 : f32 to vector<128x256xf32>
      %95 = arith.select %23, %93, %94 : vector<128x256xi1>, vector<128x256xf32>
      %cst_20 = arith.constant dense<0xFF800000> : vector<256xf32>
      %96 = vector.multi_reduction <maximumf>, %95, %cst_20 [0] : vector<128x256xf32> to vector<256xf32>
      %97 = vector.shape_cast %96 : vector<256xf32> to vector<1x256xf32>
      %c4_i32 = arith.constant 4 : i32
      %98 = vector.broadcast %c4_i32 : i32 to vector<8x1xi32>
      %99 = arith.cmpi eq, %24, %98 : vector<8x1xi32>
      %100 = vector.shape_cast %99 : vector<8x1xi1> to vector<8x1xi1>
      %101 = vector.broadcast %100 : vector<8x1xi1> to vector<8x256xi1>
      %102 = vector.shape_cast %97 : vector<1x256xf32> to vector<1x256xf32>
      %103 = vector.broadcast %102 : vector<1x256xf32> to vector<8x256xf32>
      %104 = vector.broadcast %cst_1 : f32 to vector<8x256xf32>
      %105 = arith.select %101, %103, %104 : vector<8x256xi1>, vector<8x256xf32>
      %106 = arith.maximumf %90, %105 : vector<8x256xf32>
      %107 = vector.extract_strided_slice %16 {offsets = [0, 5], sizes = [128, 1], strides = [1, 1]} : vector<128x8xf32> to vector<128x1xf32>
      %108 = vector.shape_cast %107 : vector<128x1xf32> to vector<128x1xf32>
      %109 = vector.broadcast %108 : vector<128x1xf32> to vector<128x256xf32>
      %110 = vector.broadcast %cst_1 : f32 to vector<128x256xf32>
      %111 = arith.select %23, %109, %110 : vector<128x256xi1>, vector<128x256xf32>
      %cst_21 = arith.constant dense<0xFF800000> : vector<256xf32>
      %112 = vector.multi_reduction <maximumf>, %111, %cst_21 [0] : vector<128x256xf32> to vector<256xf32>
      %113 = vector.shape_cast %112 : vector<256xf32> to vector<1x256xf32>
      %c5_i32 = arith.constant 5 : i32
      %114 = vector.broadcast %c5_i32 : i32 to vector<8x1xi32>
      %115 = arith.cmpi eq, %24, %114 : vector<8x1xi32>
      %116 = vector.shape_cast %115 : vector<8x1xi1> to vector<8x1xi1>
      %117 = vector.broadcast %116 : vector<8x1xi1> to vector<8x256xi1>
      %118 = vector.shape_cast %113 : vector<1x256xf32> to vector<1x256xf32>
      %119 = vector.broadcast %118 : vector<1x256xf32> to vector<8x256xf32>
      %120 = vector.broadcast %cst_1 : f32 to vector<8x256xf32>
      %121 = arith.select %117, %119, %120 : vector<8x256xi1>, vector<8x256xf32>
      %122 = arith.maximumf %106, %121 : vector<8x256xf32>
      %123 = vector.extract_strided_slice %16 {offsets = [0, 6], sizes = [128, 1], strides = [1, 1]} : vector<128x8xf32> to vector<128x1xf32>
      %124 = vector.shape_cast %123 : vector<128x1xf32> to vector<128x1xf32>
      %125 = vector.broadcast %124 : vector<128x1xf32> to vector<128x256xf32>
      %126 = vector.broadcast %cst_1 : f32 to vector<128x256xf32>
      %127 = arith.select %23, %125, %126 : vector<128x256xi1>, vector<128x256xf32>
      %cst_22 = arith.constant dense<0xFF800000> : vector<256xf32>
      %128 = vector.multi_reduction <maximumf>, %127, %cst_22 [0] : vector<128x256xf32> to vector<256xf32>
      %129 = vector.shape_cast %128 : vector<256xf32> to vector<1x256xf32>
      %c6_i32 = arith.constant 6 : i32
      %130 = vector.broadcast %c6_i32 : i32 to vector<8x1xi32>
      %131 = arith.cmpi eq, %24, %130 : vector<8x1xi32>
      %132 = vector.shape_cast %131 : vector<8x1xi1> to vector<8x1xi1>
      %133 = vector.broadcast %132 : vector<8x1xi1> to vector<8x256xi1>
      %134 = vector.shape_cast %129 : vector<1x256xf32> to vector<1x256xf32>
      %135 = vector.broadcast %134 : vector<1x256xf32> to vector<8x256xf32>
      %136 = vector.broadcast %cst_1 : f32 to vector<8x256xf32>
      %137 = arith.select %133, %135, %136 : vector<8x256xi1>, vector<8x256xf32>
      %138 = arith.maximumf %122, %137 : vector<8x256xf32>
      %139 = vector.extract_strided_slice %16 {offsets = [0, 7], sizes = [128, 1], strides = [1, 1]} : vector<128x8xf32> to vector<128x1xf32>
      %140 = vector.shape_cast %139 : vector<128x1xf32> to vector<128x1xf32>
      %141 = vector.broadcast %140 : vector<128x1xf32> to vector<128x256xf32>
      %142 = vector.broadcast %cst_1 : f32 to vector<128x256xf32>
      %143 = arith.select %23, %141, %142 : vector<128x256xi1>, vector<128x256xf32>
      %cst_23 = arith.constant dense<0xFF800000> : vector<256xf32>
      %144 = vector.multi_reduction <maximumf>, %143, %cst_23 [0] : vector<128x256xf32> to vector<256xf32>
      %145 = vector.shape_cast %144 : vector<256xf32> to vector<1x256xf32>
      %c7_i32 = arith.constant 7 : i32
      %146 = vector.broadcast %c7_i32 : i32 to vector<8x1xi32>
      %147 = arith.cmpi eq, %24, %146 : vector<8x1xi32>
      %148 = vector.shape_cast %147 : vector<8x1xi1> to vector<8x1xi1>
      %149 = vector.broadcast %148 : vector<8x1xi1> to vector<8x256xi1>
      %150 = vector.shape_cast %145 : vector<1x256xf32> to vector<1x256xf32>
      %151 = vector.broadcast %150 : vector<1x256xf32> to vector<8x256xf32>
      %152 = vector.broadcast %cst_1 : f32 to vector<8x256xf32>
      %153 = arith.select %149, %151, %152 : vector<8x256xi1>, vector<8x256xf32>
      %154 = arith.maximumf %138, %153 : vector<8x256xf32>
      %c0_24 = arith.constant 0 : index
      %c0_25 = arith.constant 0 : index
      %c0_26 = arith.constant 0 : index
      %155 = vector.load %arg7[%c0_24, %c0_25, %c0_26] : memref<1x8x256xf32, #tpu.memory_space<vmem>>, vector<1x8x256xf32>
      %156 = vector.shape_cast %155 : vector<1x8x256xf32> to vector<8x256xf32>
      %157 = vector.shape_cast %154 : vector<8x256xf32> to vector<1x8x256xf32>
      tpu.vector_store %arg7[%c0_24, %c0_25, %c0_26], %157 {strides = array<i32>} : memref<1x8x256xf32, #tpu.memory_space<vmem>>, vector<1x8x256xf32>,
    } else {
    }
    %c1_i32 = arith.constant 1 : i32
    %10 = arith.cmpi eq, %arg2, %c1_i32 : i32
    %11 = arith.extui %10 : i1 to i32
    %cst_3 = arith.constant 0xFF800000 : f32
    %c0_i32_4 = arith.constant 0 : i32
    %12 = arith.cmpi ne, %11, %c0_i32_4 : i32
    scf.if %12 {
      %c0 = arith.constant 0 : index
      %c0_5 = arith.constant 0 : index
      %c0_6 = arith.constant 0 : index
      %13 = vector.load %arg7[%c0, %c0_5, %c0_6] : memref<1x8x256xf32, #tpu.memory_space<vmem>>, vector<1x8x256xf32>
      %14 = vector.broadcast %cst_3 : f32 to vector<1x8x256xf32>
      %15 = arith.cmpf oeq, %13, %14 : vector<1x8x256xf32>
      %cst_7 = arith.constant 0.000000e+00 : f32
      %16 = vector.broadcast %cst_7 : f32 to vector<1x8x256xf32>
      %17 = arith.select %15, %16, %13 : vector<1x8x256xi1>, vector<1x8x256xf32>
      %c0_8 = arith.constant 0 : index
      %c0_9 = arith.constant 0 : index
      %c0_10 = arith.constant 0 : index
      %18 = vector.load %arg7[%c0_8, %c0_9, %c0_10] : memref<1x8x256xf32, #tpu.memory_space<vmem>>, vector<1x8x256xf32>
      tpu.vector_store %arg7[%c0_8, %c0_9, %c0_10], %17 {strides = array<i32>} : memref<1x8x256xf32, #tpu.memory_space<vmem>>, vector<1x8x256xf32>,
    } else {
    }
    return
  }
  func.func @transform_0(%arg0: i32, %arg1: i32, %arg2: i32, %arg3: memref<4xi32, #tpu.memory_space<smem>>, %arg4: memref<4xi32, #tpu.memory_space<smem>>) -> (i32, i32, i32) {
    %c2_i32 = arith.constant 2 : i32
    %0 = arith.muli %arg0, %c2_i32 : i32
    %1 = arith.addi %0, %arg1 : i32
    %2 = arith.index_cast %1 : i32 to index
    %3 = memref.load %arg3[%2] : memref<4xi32, #tpu.memory_space<smem>>
    %4 = arith.addi %3, %arg2 : i32
    %c1_i32 = arith.constant 1 : i32
    %5 = arith.minsi %4, %c1_i32 : i32
    %c0_i32 = arith.constant 0 : i32
    %c0_i32_0 = arith.constant 0 : i32
    return %arg0, %5, %c0_i32 : i32, i32, i32
  }
  func.func @transform_1(%arg0: i32, %arg1: i32, %arg2: i32, %arg3: memref<4xi32, #tpu.memory_space<smem>>, %arg4: memref<4xi32, #tpu.memory_space<smem>>) -> (i32, i32, i32) {
    %c2_i32 = arith.constant 2 : i32
    %0 = arith.muli %arg0, %c2_i32 : i32
    %1 = arith.addi %0, %arg1 : i32
    %2 = arith.index_cast %1 : i32 to index
    %3 = memref.load %arg3[%2] : memref<4xi32, #tpu.memory_space<smem>>
    %4 = arith.addi %3, %arg2 : i32
    %c1_i32 = arith.constant 1 : i32
    %5 = arith.minsi %4, %c1_i32 : i32
    %c0_i32 = arith.constant 0 : i32
    %c0_i32_0 = arith.constant 0 : i32
    return %arg0, %5, %c0_i32 : i32, i32, i32
  }
  func.func @transform_2(%arg0: i32, %arg1: i32, %arg2: i32, %arg3: memref<4xi32, #tpu.memory_space<smem>>, %arg4: memref<4xi32, #tpu.memory_space<smem>>) -> (i32, i32, i32) {
    %c0_i32 = arith.constant 0 : i32
    %c0_i32_0 = arith.constant 0 : i32
    return %arg0, %c0_i32, %arg1 : i32, i32, i32
  }
}

</mosaic_0001>

<llo_original>
// kernel: tpu_custom_call.1
$region0: #{tpu_custom_call.1}
  #allocation0 [shape = 'u32[]', space=smem, size = 0x4, offset = 0x4, fixed_abs, tag = 'smem constant byte address 0x4 - core index']
  #allocation1 [shape = 'u32[144,128]{1,0:T(1,128)}', space=vmem, size = 0x12000, scoped, tag = 'internal scratch']
  #allocation2 [shape = 's32[1]{0}', space=sflag, size = 0x4, scoped, tag = 'scoped memory for tpu_custom_call.1']
  #allocation3 [shape = 'u8[512]{0}', space=smem, size = 0x200, scoped, tag = 'prefetched SMEM operand 0']
  #allocation4 [shape = 'u8[512]{0}', space=smem, size = 0x200, scoped, tag = 'prefetched SMEM operand 1']
  %s0 = inlined_call_operand.vmem [shape: s32[4], index: 0, kind: input, shape index: {}]
  %s1 = inlined_call_operand.vmem [shape: s32[4], index: 1, kind: input, shape index: {}]
  %s2 = inlined_call_operand.vmem [shape: s32[2,256,1], index: 2, kind: input, shape index: {}]
  %s3 = inlined_call_operand.vmem [shape: f32[2,256,8], index: 3, kind: input, shape index: {}]
  %s4 = inlined_call_operand.hbm [shape: f32[2,8,512], index: 4, kind: output, shape index: {}]
  %s5 = sld [smem:[#allocation0]]
  $region53: #{tpu_custom_call.1} parent=0
    _
  %s7 = ssub.s32 1, %s5
  %s8 = scalar_select 0, %s7, %s5
  %s9 = sshll.u32 %s0, 4
  %s10 = int_to_ptr.vmem [resolvable:$true] %s9
  %12 = dma.vmem_to_smem %s10, 16, [#allocation3], [#allocation2]
  %s13 = sshll.u32 %s1, 4
  %s14 = int_to_ptr.vmem [resolvable:$true] %s13
  %16 = dma.vmem_to_smem %s14, 16, [#allocation4], [#allocation2]
  %17 = dma.done [#allocation2], 32
  %18 = sfence
  $region1: #{tpu_custom_call.1} parent=0
    #allocation5 [shape = 'u8[16384]{0}', space=vmem, size = 0x4000, scoped, tag = 'output window, operand 0']
    #allocation6 [shape = 's32[2]{0}', space=sflag, size = 0x8, scoped, tag = 'scoped memory for tpu_custom_call.1']
    %19 = vsyncpa [#allocation6], 0
    %s20 = scalar_lea.sflag [#allocation6], 1
    %21 = vsyncpa %s20, 0
    loop: start=0, step=1, limit=10
    $region2: #{tpu_custom_call.1} parent=1 // loop_pre_header
      _
    $region3: #{tpu_custom_call.1} parent=1 // loop_header
      %s23 = sphi 0, %s27
      %p24 = scmp.ge.s32.totalorder %s23, 10
      %s30 = sphi 0, %s49
      %s31 = sphi 0, %s45
      %s32 = sphi 0, %s41
      %s33 = sphi 0, %s30
      %s34 = sphi 0, %s31
      %s35 = sphi 0, %s32
      %s36 = sphi 0, %s33
      %s37 = sphi 0, %s34
      %s38 = sphi 0, %s35
      %s66 = sphi 0, %s68
      %s69 = sphi 0, %s66
      %s70 = sphi 0, %s69
      %s86 = sphi 0, %s70
      %s106 = sphi 0, %s108
      %s109 = sphi 0, %s106
      %s110 = sphi 0, %s109
      %s126 = sphi 0, %s110
      %s134 = sphi 0, %s136
      %s137 = sphi 0, %s134
      %s138 = sphi 0, %s137
      %s154 = sphi 0, %s138
    $region4: #{tpu_custom_call.1} parent=1 // loop_header_branch
      %26 = sbr.rel (%p24) target = $region8
    $region5: #{tpu_custom_call.1} parent=1 // loop_body
      %s28 = ssub.s32 %s23, 1
      %s29 = ssub.s32 %s23, 2
      %s39 = sadd.s32 1, %s32
      %p40 = scmp.ge.s32.totalorder %s39, 2
      %s41 = scalar_select %p40, 0, %s39
      %s42 = sadd.s32 1, %s31
      %s43 = scalar_select %p40, %s42, %s31
      %p44 = scmp.ge.s32.totalorder %s43, 2
      %s45 = scalar_select %p44, 0, %s43
      %s46 = sadd.s32 1, %s30
      %s47 = scalar_select %p44, %s46, %s30
      %p48 = scmp.ge.s32.totalorder %s47, 2
      %s49 = scalar_select %p48, 0, %s47
      %s50 = smul.u32 %s30, 2
      %s51 = sadd.s32 %s50, %s31
      %s52 = sld [smem:[#allocation3 + %s51]]
      %s53 = sadd.s32 %s52, %s32
      %p54 = scmp.lt.s32.totalorder %s53, 1
      %s55 = scalar_select %p54, %s53, 1
      %s56 = smul.u32 %s49, 2
      %s57 = sadd.s32 %s56, %s45
      %s58 = sld [smem:[#allocation3 + %s57]]
      %s59 = sadd.s32 %s58, %s41
      %p60 = scmp.lt.s32.totalorder %s59, 1
      %s61 = scalar_select %p60, %s59, 1
      %s62 = ssub.s32 %s30, %s49
      %s63 = ssub.s32 %s55, %s61
      %s64 = sor.u32 %s62, %s63
      %p65 = scmp.eq.s32.totalorder %s64, 0
      %s67 = sadd.s32 %s66, 1
      %s68 = scalar_select %p65, %s66, %s67
      %p71 = pneg %p65
      %p72 = scmp.eq.s32.totalorder %s23, 7
      %p73 = por %p71, %p72
      %p74 = scmp.ne.s32.totalorder %s66, %s69
      %p75 = scmp.eq.s32.totalorder %s23, 0
      %p76 = por %p74, %p75
      %p77 = scmp.ne.s32.totalorder %s66, %s69
      %p78 = scmp.eq.s32.totalorder %s28, 7
      %p79 = por %p77, %p78
      %p80 = scmp.ne.s32.totalorder %s69, %s70
      %p81 = scmp.eq.s32.totalorder %s28, 0
      %p82 = por %p80, %p81
      %p83 = scmp.ne.s32.totalorder %s69, %s70
      %p84 = scmp.eq.s32.totalorder %s29, 7
      %p85 = por %p83, %p84
      %p87 = scmp.ne.s32.totalorder %s70, %s86
      %p88 = scmp.eq.s32.totalorder %s29, 0
      %p89 = por %p87, %p88
      %s90 = smul.u32 %s30, 2
      %s91 = sadd.s32 %s90, %s31
      %s92 = sld [smem:[#allocation3 + %s91]]
      %s93 = sadd.s32 %s92, %s32
      %p94 = scmp.lt.s32.totalorder %s93, 1
      %s95 = scalar_select %p94, %s93, 1
      %s96 = smul.u32 %s49, 2
      %s97 = sadd.s32 %s96, %s45
      %s98 = sld [smem:[#allocation3 + %s97]]
      %s99 = sadd.s32 %s98, %s41
      %p100 = scmp.lt.s32.totalorder %s99, 1
      %s101 = scalar_select %p100, %s99, 1
      %s102 = ssub.s32 %s30, %s49
      %s103 = ssub.s32 %s95, %s101
      %s104 = sor.u32 %s102, %s103
      %p105 = scmp.eq.s32.totalorder %s104, 0
      %s107 = sadd.s32 %s106, 1
      %s108 = scalar_select %p105, %s106, %s107
      %p111 = pneg %p105
      %p112 = scmp.eq.s32.totalorder %s23, 7
      %p113 = por %p111, %p112
      %p114 = scmp.ne.s32.totalorder %s106, %s109
      %p115 = scmp.eq.s32.totalorder %s23, 0
      %p116 = por %p114, %p115
      %p117 = scmp.ne.s32.totalorder %s106, %s109
      %p118 = scmp.eq.s32.totalorder %s28, 7
      %p119 = por %p117, %p118
      %p120 = scmp.ne.s32.totalorder %s109, %s110
      %p121 = scmp.eq.s32.totalorder %s28, 0
      %p122 = por %p120, %p121
      %p123 = scmp.ne.s32.totalorder %s109, %s110
      %p124 = scmp.eq.s32.totalorder %s29, 7
      %p125 = por %p123, %p124
      %p127 = scmp.ne.s32.totalorder %s110, %s126
      %p128 = scmp.eq.s32.totalorder %s29, 0
      %p129 = por %p127, %p128
      %s130 = ssub.s32 %s30, %s49
      %s131 = ssub.s32 %s31, %s45
      %s132 = sor.u32 %s130, %s131
      %p133 = scmp.eq.s32.totalorder %s132, 0
      %s135 = sadd.s32 %s134, 1
      %s136 = scalar_select %p133, %s134, %s135
      %p139 = pneg %p133
      %p140 = scmp.eq.s32.totalorder %s23, 7
      %p141 = por %p139, %p140
      %p142 = scmp.ne.s32.totalorder %s134, %s137
      %p143 = scmp.eq.s32.totalorder %s23, 0
      %p144 = por %p142, %p143
      %p145 = scmp.ne.s32.totalorder %s134, %s137
      %p146 = scmp.eq.s32.totalorder %s28, 7
      %p147 = por %p145, %p146
      %p148 = scmp.ne.s32.totalorder %s137, %s138
      %p149 = scmp.eq.s32.totalorder %s28, 0
      %p150 = por %p148, %p149
      %p151 = scmp.ne.s32.totalorder %s137, %s138
      %p152 = scmp.eq.s32.totalorder %s29, 7
      %p153 = por %p151, %p152
      %p155 = scmp.ne.s32.totalorder %s138, %s154
      %p156 = scmp.eq.s32.totalorder %s29, 0
      %p157 = por %p155, %p156
      %p158 = scmp.le.s32.totalorder 1, %s23
      %p159 = scmp.lt.s32.totalorder %s23, 9
      %p160 = pnand %p158, %p159
      %p161 = pneg %p160
      // Predicated region
      $region9: #{tpu_custom_call.1} parent=5 // pred_check
        _
      $region10: #{tpu_custom_call.1} parent=5 // pred_check_branch
        %163 = sbr.rel (%p160) target = $region12
      $region11: #{tpu_custom_call.1} parent=5 // pred_region
        %s164 = ssub.s32 %s23, 1
      $region12: #{tpu_custom_call.1} parent=5 // pred_fallthru
        _
      %p165 = scmp.lt.s32.totalorder %s23, 8
      // Predicated region
      $region13: #{tpu_custom_call.1} parent=5 // pred_check
        %p166 = pneg %p165
      $region14: #{tpu_custom_call.1} parent=5 // pred_check_branch
        %168 = sbr.rel (%p166) target = $region16
      $region15: #{tpu_custom_call.1} parent=5 // pred_region
        // Predicated region
        $region17: #{tpu_custom_call.1} parent=15 // pred_check
          %p169 = pneg %p76
        $region18: #{tpu_custom_call.1} parent=15 // pred_check_branch
          %171 = sbr.rel (%p169) target = $region20
        $region19: #{tpu_custom_call.1} parent=15 // pred_region
          %s172 = smul.u32 %s30, 2
          %s173 = sadd.s32 %s172, %s31
          %s174 = sld [smem:[#allocation3 + %s173]]
          %s175 = sadd.s32 %s174, %s32
          %p176 = scmp.lt.s32.totalorder %s175, 1
          %s177 = scalar_select %p176, %s175, 1
          %s178 = smul.u32 16, %s177
          %p179 = scmp.lt.s32.totalorder %s30, 1
          %s180 = scalar_select %p179, %s30, 1
          %p181 = scmp.lt.s32.totalorder %s178, 31
          %s182 = scalar_select %p181, %s178, 31
          %s183 = smul.addr %s180, 32
          %s184 = sadd.s32 %s182, %s183
          %s185 = smul.addr %s184, 8
          %s186 = scalar_lea.vmem %s2, %s185
          %s187 = smul.u32 %s30, 2
          %s188 = sadd.s32 %s187, %s31
          %s189 = sld [smem:[#allocation3 + %s188]]
          %s190 = sadd.s32 %s189, %s32
          %p191 = scmp.lt.s32.totalorder %s190, 1
          %s192 = scalar_select %p191, %s190, 1
          %s193 = smul.u32 16, %s192
        $region20: #{tpu_custom_call.1} parent=15 // pred_fallthru
          _
        // Predicated region
        $region21: #{tpu_custom_call.1} parent=15 // pred_check
          %p194 = pneg %p116
        $region22: #{tpu_custom_call.1} parent=15 // pred_check_branch
          %196 = sbr.rel (%p194) target = $region24
        $region23: #{tpu_custom_call.1} parent=15 // pred_region
          %s197 = smul.u32 %s30, 2
          %s198 = sadd.s32 %s197, %s31
          %s199 = sld [smem:[#allocation3 + %s198]]
          %s200 = sadd.s32 %s199, %s32
          %p201 = scmp.lt.s32.totalorder %s200, 1
          %s202 = scalar_select %p201, %s200, 1
          %s203 = smul.u32 16, %s202
          %p204 = scmp.lt.s32.totalorder %s30, 1
          %s205 = scalar_select %p204, %s30, 1
          %p206 = scmp.lt.s32.totalorder %s203, 31
          %s207 = scalar_select %p206, %s203, 31
          %s208 = smul.addr %s205, 32
          %s209 = sadd.s32 %s207, %s208
          %s210 = smul.addr %s209, 8
          %s211 = scalar_lea.vmem %s3, %s210
          %s212 = smul.u32 %s30, 2
          %s213 = sadd.s32 %s212, %s31
          %s214 = sld [smem:[#allocation3 + %s213]]
          %s215 = sadd.s32 %s214, %s32
          %p216 = scmp.lt.s32.totalorder %s215, 1
          %s217 = scalar_select %p216, %s215, 1
          %s218 = smul.u32 16, %s217
        $region24: #{tpu_custom_call.1} parent=15 // pred_fallthru
          _
      $region16: #{tpu_custom_call.1} parent=5 // pred_fallthru
        _
      %p219 = scmp.le.s32.totalorder 1, %s23
      %p220 = scmp.lt.s32.totalorder %s23, 9
      %p221 = pnand %p219, %p220
      %p222 = pneg %p221
      // Predicated region
      $region25: #{tpu_custom_call.1} parent=5 // pred_check
        _
      $region26: #{tpu_custom_call.1} parent=5 // pred_check_branch
        %224 = sbr.rel (%p221) target = $region28
      $region27: #{tpu_custom_call.1} parent=5 // pred_region
        %s225 = ssub.s32 %s23, 1
        %s226 = smul.u32 %s33, 2
        %s227 = sadd.s32 %s226, %s34
        %s228 = sld [smem:[#allocation3 + %s227]]
        %s229 = sadd.s32 %s228, %s35
        %p230 = scmp.lt.s32.totalorder %s229, 1
        %s231 = scalar_select %p230, %s229, 1
        %s232 = smul.u32 16, %s231
        %p233 = scmp.lt.s32.totalorder %s33, 1
        %s234 = scalar_select %p233, %s33, 1
        %p235 = scmp.lt.s32.totalorder %s232, 31
        %s236 = scalar_select %p235, %s232, 31
        %s237 = smul.addr %s234, 32
        %s238 = sadd.s32 %s236, %s237
        %s239 = smul.addr %s238, 8
        %s240 = scalar_lea.vmem %s2, %s239
        %p241 = pneg %p82
        %p242 = pneg %p79
        %s243 = smul.u32 %s33, 2
        %s244 = sadd.s32 %s243, %s34
        %s245 = sld [smem:[#allocation3 + %s244]]
        %s246 = sadd.s32 %s245, %s35
        %p247 = scmp.lt.s32.totalorder %s246, 1
        %s248 = scalar_select %p247, %s246, 1
        %s249 = smul.u32 16, %s248
        %p250 = scmp.lt.s32.totalorder %s33, 1
        %s251 = scalar_select %p250, %s33, 1
        %p252 = scmp.lt.s32.totalorder %s249, 31
        %s253 = scalar_select %p252, %s249, 31
        %s254 = smul.addr %s251, 32
        %s255 = sadd.s32 %s253, %s254
        %s256 = smul.addr %s255, 8
        %s257 = scalar_lea.vmem %s3, %s256
        %p258 = pneg %p122
        %p259 = pneg %p119
        %p260 = pneg %p150
        %p261 = pneg %p147
        %s262 = sand.u32 %s137, 1
        %s263 = scalar_lea.sflag [#allocation6], %s262
        %s264 = sand.u32 %s137, 1
        %s265 = smul.addr %s264, 16
        %s266 = scalar_lea.vmem [#allocation5], %s265
        %s267 = smul.u32 %s33, 2
        %s268 = sadd.s32 %s267, %s34
        %s269 = sld [smem:[#allocation3 + %s268]]
        %s270 = sadd.s32 %s269, %s35
        %p271 = scmp.lt.s32.totalorder %s270, 1
        %s272 = scalar_select %p271, %s270, 1
        %s273 = smul.u32 16, %s272
        %p274 = scmp.lt.s32.totalorder %s33, 1
        %s275 = scalar_select %p274, %s33, 1
        %p276 = scmp.lt.s32.totalorder %s273, 31
        %s277 = scalar_select %p276, %s273, 31
        %s278 = smul.addr %s275, 32
        %s279 = sadd.s32 %s277, %s278
        %s280 = smul.addr %s279, 8
        %s281 = scalar_lea.vmem %s2, %s280
        %s282 = smul.u32 %s33, 2
        %s283 = sadd.s32 %s282, %s34
        %s284 = sld [smem:[#allocation3 + %s283]]
        %s285 = sadd.s32 %s284, %s35
        %p286 = scmp.lt.s32.totalorder %s285, 1
        %s287 = scalar_select %p286, %s285, 1
        %s288 = smul.u32 16, %s287
        %s289 = smul.u32 %s33, 2
        %s290 = sadd.s32 %s289, %s34
        %s291 = sld [smem:[#allocation3 + %s290]]
        %s292 = sadd.s32 %s291, %s35
        %p293 = scmp.lt.s32.totalorder %s292, 1
        %s294 = scalar_select %p293, %s292, 1
        %s295 = smul.u32 16, %s294
        %p296 = scmp.lt.s32.totalorder %s33, 1
        %s297 = scalar_select %p296, %s33, 1
        %p298 = scmp.lt.s32.totalorder %s295, 31
        %s299 = scalar_select %p298, %s295, 31
        %s300 = smul.addr %s297, 32
        %s301 = sadd.s32 %s299, %s300
        %s302 = smul.addr %s301, 8
        %s303 = scalar_lea.vmem %s3, %s302
        %s304 = smul.u32 %s33, 2
        %s305 = sadd.s32 %s304, %s34
        %s306 = sld [smem:[#allocation3 + %s305]]
        %s307 = sadd.s32 %s306, %s35
        %p308 = scmp.lt.s32.totalorder %s307, 1
        %s309 = scalar_select %p308, %s307, 1
        %s310 = smul.u32 16, %s309
        %s311 = smul.u32 2, %s34
        %p312 = scmp.eq.s32.totalorder %s35, 0
        // Predicated region
        $region29: #{tpu_custom_call.1} parent=27 // pred_check
          %p313 = pneg %p312
        $region30: #{tpu_custom_call.1} parent=27 // pred_check_branch
          %315 = sbr.rel (%p313) target = $region32
        $region31: #{tpu_custom_call.1} parent=27 // pred_region
          %316 = vst [vmem:[%s266] sm:$0xff] -inf
          %317 = vst [vmem:[%s266 + $0x8] sm:$0xff] -inf
        $region32: #{tpu_custom_call.1} parent=27 // pred_fallthru
          _
        %s318 = smul.u32 %s33, 2
        %s319 = sadd.s32 %s318, %s34
        %s320 = sld [smem:[#allocation4 + %s319]]
        %p321 = scmp.lt.s32.totalorder %s35, %s320
        // Predicated region
        $region33: #{tpu_custom_call.1} parent=27 // pred_check
          %p322 = pneg %p321
        $region34: #{tpu_custom_call.1} parent=27 // pred_check_branch
          %324 = sbr.rel (%p322) target = $region36
        $region35: #{tpu_custom_call.1} parent=27 // pred_region
          %v325 = vld [vmem:[%s281] sm:$0xff]
          %v326 = vld [vmem:[%s281 + $0x8] sm:$0xff]
          %v327 = vld [vmem:[%s281 + $0x10] sm:$0xff]
          %v328 = vld [vmem:[%s281 + $0x18] sm:$0xff]
          %v329 = vld [vmem:[%s281 + $0x20] sm:$0xff]
          %v330 = vld [vmem:[%s281 + $0x28] sm:$0xff]
          %v331 = vld [vmem:[%s281 + $0x30] sm:$0xff]
          %v332 = vld [vmem:[%s281 + $0x38] sm:$0xff]
          %v333 = vld [vmem:[%s281 + $0x40] sm:$0xff]
          %v334 = vld [vmem:[%s281 + $0x48] sm:$0xff]
          %v335 = vld [vmem:[%s281 + $0x50] sm:$0xff]
          %v336 = vld [vmem:[%s281 + $0x58] sm:$0xff]
          %v337 = vld [vmem:[%s281 + $0x60] sm:$0xff]
          %v338 = vld [vmem:[%s281 + $0x68] sm:$0xff]
          %v339 = vld [vmem:[%s281 + $0x70] sm:$0xff]
          %v340 = vld [vmem:[%s281 + $0x78] sm:$0xff]
          %v341 = vld [vmem:[%s303] sm:$0xff]
          %v342 = vld [vmem:[%s303 + $0x8] sm:$0xff]
          %v343 = vld [vmem:[%s303 + $0x10] sm:$0xff]
          %v344 = vld [vmem:[%s303 + $0x18] sm:$0xff]
          %v345 = vld [vmem:[%s303 + $0x20] sm:$0xff]
          %v346 = vld [vmem:[%s303 + $0x28] sm:$0xff]
          %v347 = vld [vmem:[%s303 + $0x30] sm:$0xff]
          %v348 = vld [vmem:[%s303 + $0x38] sm:$0xff]
          %v349 = vld [vmem:[%s303 + $0x40] sm:$0xff]
          %v350 = vld [vmem:[%s303 + $0x48] sm:$0xff]
          %v351 = vld [vmem:[%s303 + $0x50] sm:$0xff]
          %v352 = vld [vmem:[%s303 + $0x58] sm:$0xff]
          %v353 = vld [vmem:[%s303 + $0x60] sm:$0xff]
          %v354 = vld [vmem:[%s303 + $0x68] sm:$0xff]
          %v355 = vld [vmem:[%s303 + $0x70] sm:$0xff]
          %v356 = vld [vmem:[%s303 + $0x78] sm:$0xff]
          %v357 = vlaneseq
          %v358 = vand.u32 %v357, 127
          %v359 = vadd.s32 %v358, 128
          %s360 = smul.u32 %s34, 256
          %v361 = vstv %s360
          %v362 = vsub.s32 %v325, %v361
          %v363 = vsub.s32 %v326, %v361
          %v364 = vsub.s32 %v327, %v361
          %v365 = vsub.s32 %v328, %v361
          %v366 = vsub.s32 %v329, %v361
          %v367 = vsub.s32 %v330, %v361
          %v368 = vsub.s32 %v331, %v361
          %v369 = vsub.s32 %v332, %v361
          %v370 = vsub.s32 %v333, %v361
          %v371 = vsub.s32 %v334, %v361
          %v372 = vsub.s32 %v335, %v361
          %v373 = vsub.s32 %v336, %v361
          %v374 = vsub.s32 %v337, %v361
          %v375 = vsub.s32 %v338, %v361
          %v376 = vsub.s32 %v339, %v361
          %v377 = vsub.s32 %v340, %v361
          %378 = vset.pattern.permute.xlu0 0
          %379 = vperm.xlu0 %378, %v362
          %v380 = vpop.permute.xlu0 %379
          %381 = vset.pattern.permute.xlu0 0
          %382 = vperm.xlu0 %381, %v363
          %v383 = vpop.permute.xlu0 %382
          %384 = vset.pattern.permute.xlu0 0
          %385 = vperm.xlu0 %384, %v364
          %v386 = vpop.permute.xlu0 %385
          %387 = vset.pattern.permute.xlu0 0
          %388 = vperm.xlu0 %387, %v365
          %v389 = vpop.permute.xlu0 %388
          %390 = vset.pattern.permute.xlu0 0
          %391 = vperm.xlu0 %390, %v366
          %v392 = vpop.permute.xlu0 %391
          %393 = vset.pattern.permute.xlu0 0
          %394 = vperm.xlu0 %393, %v367
          %v395 = vpop.permute.xlu0 %394
          %396 = vset.pattern.permute.xlu0 0
          %397 = vperm.xlu0 %396, %v368
          %v398 = vpop.permute.xlu0 %397
          %399 = vset.pattern.permute.xlu0 0
          %400 = vperm.xlu0 %399, %v369
          %v401 = vpop.permute.xlu0 %400
          %402 = vset.pattern.permute.xlu0 0
          %403 = vperm.xlu0 %402, %v370
          %v404 = vpop.permute.xlu0 %403
          %405 = vset.pattern.permute.xlu0 0
          %406 = vperm.xlu0 %405, %v371
          %v407 = vpop.permute.xlu0 %406
          %408 = vset.pattern.permute.xlu0 0
          %409 = vperm.xlu0 %408, %v372
          %v410 = vpop.permute.xlu0 %409
          %411 = vset.pattern.permute.xlu0 0
          %412 = vperm.xlu0 %411, %v373
          %v413 = vpop.permute.xlu0 %412
          %414 = vset.pattern.permute.xlu0 0
          %415 = vperm.xlu0 %414, %v374
          %v416 = vpop.permute.xlu0 %415
          %417 = vset.pattern.permute.xlu0 0
          %418 = vperm.xlu0 %417, %v375
          %v419 = vpop.permute.xlu0 %418
          %420 = vset.pattern.permute.xlu0 0
          %421 = vperm.xlu0 %420, %v376
          %v422 = vpop.permute.xlu0 %421
          %423 = vset.pattern.permute.xlu0 0
          %424 = vperm.xlu0 %423, %v377
          %v425 = vpop.permute.xlu0 %424
          %vm426 = vcmp.eq.s32.totalorder %v380, %v358
          %vm427 = vcmp.eq.s32.totalorder %v380, %v359
          %vm428 = vcmp.eq.s32.totalorder %v383, %v358
          %vm429 = vcmp.eq.s32.totalorder %v383, %v359
          %vm430 = vcmp.eq.s32.totalorder %v386, %v358
          %vm431 = vcmp.eq.s32.totalorder %v386, %v359
          %vm432 = vcmp.eq.s32.totalorder %v389, %v358
          %vm433 = vcmp.eq.s32.totalorder %v389, %v359
          %vm434 = vcmp.eq.s32.totalorder %v392, %v358
          %vm435 = vcmp.eq.s32.totalorder %v392, %v359
          %vm436 = vcmp.eq.s32.totalorder %v395, %v358
          %vm437 = vcmp.eq.s32.totalorder %v395, %v359
          %vm438 = vcmp.eq.s32.totalorder %v398, %v358
          %vm439 = vcmp.eq.s32.totalorder %v398, %v359
          %vm440 = vcmp.eq.s32.totalorder %v401, %v358
          %vm441 = vcmp.eq.s32.totalorder %v401, %v359
          %vm442 = vcmp.eq.s32.totalorder %v404, %v358
          %vm443 = vcmp.eq.s32.totalorder %v404, %v359
          %vm444 = vcmp.eq.s32.totalorder %v407, %v358
          %vm445 = vcmp.eq.s32.totalorder %v407, %v359
          %vm446 = vcmp.eq.s32.totalorder %v410, %v358
          %vm447 = vcmp.eq.s32.totalorder %v410, %v359
          %vm448 = vcmp.eq.s32.totalorder %v413, %v358
          %vm449 = vcmp.eq.s32.totalorder %v413, %v359
          %vm450 = vcmp.eq.s32.totalorder %v416, %v358
          %vm451 = vcmp.eq.s32.totalorder %v416, %v359
          %vm452 = vcmp.eq.s32.totalorder %v419, %v358
          %vm453 = vcmp.eq.s32.totalorder %v419, %v359
          %vm454 = vcmp.eq.s32.totalorder %v422, %v358
          %vm455 = vcmp.eq.s32.totalorder %v422, %v359
          %vm456 = vcmp.eq.s32.totalorder %v425, %v358
          %vm457 = vcmp.eq.s32.totalorder %v425, %v359
          %v458 = vlaneseq
          %v459 = vshrl.u32 %v458, 7
          %v460 = vld [vmem:[%s266] sm:$0xff]
          %v461 = vld [vmem:[%s266 + $0x8] sm:$0xff]
          %463 = vset.pattern.permute.xlu0 0
          %464 = vperm.xlu0 %463, %v341
          %v465 = vpop.permute.xlu0 %464
          %468 = vset.pattern.permute.xlu0 0
          %469 = vperm.xlu0 %468, %v342
          %v470 = vpop.permute.xlu0 %469
          %473 = vset.pattern.permute.xlu0 0
          %474 = vperm.xlu0 %473, %v343
          %v475 = vpop.permute.xlu0 %474
          %478 = vset.pattern.permute.xlu0 0
          %479 = vperm.xlu0 %478, %v344
          %v480 = vpop.permute.xlu0 %479
          %483 = vset.pattern.permute.xlu0 0
          %484 = vperm.xlu0 %483, %v345
          %v485 = vpop.permute.xlu0 %484
          %488 = vset.pattern.permute.xlu0 0
          %489 = vperm.xlu0 %488, %v346
          %v490 = vpop.permute.xlu0 %489
          %493 = vset.pattern.permute.xlu0 0
          %494 = vperm.xlu0 %493, %v347
          %v495 = vpop.permute.xlu0 %494
          %498 = vset.pattern.permute.xlu0 0
          %499 = vperm.xlu0 %498, %v348
          %v500 = vpop.permute.xlu0 %499
          %503 = vset.pattern.permute.xlu0 0
          %504 = vperm.xlu0 %503, %v349
          %v505 = vpop.permute.xlu0 %504
          %508 = vset.pattern.permute.xlu0 0
          %509 = vperm.xlu0 %508, %v350
          %v510 = vpop.permute.xlu0 %509
          %513 = vset.pattern.permute.xlu0 0
          %514 = vperm.xlu0 %513, %v351
          %v515 = vpop.permute.xlu0 %514
          %518 = vset.pattern.permute.xlu0 0
          %519 = vperm.xlu0 %518, %v352
          %v520 = vpop.permute.xlu0 %519
          %523 = vset.pattern.permute.xlu0 0
          %524 = vperm.xlu0 %523, %v353
          %v525 = vpop.permute.xlu0 %524
          %528 = vset.pattern.permute.xlu0 0
          %529 = vperm.xlu0 %528, %v354
          %v530 = vpop.permute.xlu0 %529
          %533 = vset.pattern.permute.xlu0 0
          %534 = vperm.xlu0 %533, %v355
          %v535 = vpop.permute.xlu0 %534
          %538 = vset.pattern.permute.xlu0 0
          %539 = vperm.xlu0 %538, %v356
          %v540 = vpop.permute.xlu0 %539
          %v542 = vsel %vm426, %v465, -inf
          %v543 = vsel %vm427, %v465, -inf
          %v544 = vsel %vm428, %v470, -inf
          %v545 = vsel %vm429, %v470, -inf
          %v546 = vsel %vm430, %v475, -inf
          %v547 = vsel %vm431, %v475, -inf
          %v548 = vsel %vm432, %v480, -inf
          %v549 = vsel %vm433, %v480, -inf
          %v550 = vsel %vm434, %v485, -inf
          %v551 = vsel %vm435, %v485, -inf
          %v552 = vsel %vm436, %v490, -inf
          %v553 = vsel %vm437, %v490, -inf
          %v554 = vsel %vm438, %v495, -inf
          %v555 = vsel %vm439, %v495, -inf
          %v556 = vsel %vm440, %v500, -inf
          %v557 = vsel %vm441, %v500, -inf
          %v558 = vsel %vm442, %v505, -inf
          %v559 = vsel %vm443, %v505, -inf
          %v560 = vsel %vm444, %v510, -inf
          %v561 = vsel %vm445, %v510, -inf
          %v562 = vsel %vm446, %v515, -inf
          %v563 = vsel %vm447, %v515, -inf
          %v564 = vsel %vm448, %v520, -inf
          %v565 = vsel %vm449, %v520, -inf
          %v566 = vsel %vm450, %v525, -inf
          %v567 = vsel %vm451, %v525, -inf
          %v568 = vsel %vm452, %v530, -inf
          %v569 = vsel %vm453, %v530, -inf
          %v570 = vsel %vm454, %v535, -inf
          %v571 = vsel %vm455, %v535, -inf
          %v572 = vsel %vm456, %v540, -inf
          %v573 = vsel %vm457, %v540, -inf
          %v574 = vmax.f32 %v542, %v546
          %v575 = vmax.f32 %v544, %v548
          %v576 = vmax.f32 %v574, %v550
          %v577 = vmax.f32 %v575, %v552
          %v578 = vmax.f32 %v576, %v554
          %v579 = vmax.f32 %v577, %v556
          %v580 = vmax.f32 %v578, %v558
          %v581 = vmax.f32 %v579, %v560
          %v582 = vmax.f32 %v580, %v562
          %v583 = vmax.f32 %v581, %v564
          %v584 = vmax.f32 %v582, %v566
          %v585 = vmax.f32 %v583, %v568
          %v586 = vmax.f32 %v584, %v570
          %v587 = vmax.f32 %v585, %v572
          %v588 = vmax.f32 %v586, %v587
          %v589 = vrot.slane %v588, 4
          %v590 = vmax.f32 %v588, %v589
          %v591 = vrot.slane %v590, 2
          %v592 = vmax.f32 %v590, %v591
          %v593 = vrot.slane %v592, 1
          %v594 = vmax.f32 %v592, %v593
          %v595 = vmax.f32 %v543, %v547
          %v596 = vmax.f32 %v545, %v549
          %v597 = vmax.f32 %v595, %v551
          %v598 = vmax.f32 %v596, %v553
          %v599 = vmax.f32 %v597, %v555
          %v600 = vmax.f32 %v598, %v557
          %v601 = vmax.f32 %v599, %v559
          %v602 = vmax.f32 %v600, %v561
          %v603 = vmax.f32 %v601, %v563
          %v604 = vmax.f32 %v602, %v565
          %v605 = vmax.f32 %v603, %v567
          %v606 = vmax.f32 %v604, %v569
          %v607 = vmax.f32 %v605, %v571
          %v608 = vmax.f32 %v606, %v573
          %v609 = vmax.f32 %v607, %v608
          %v610 = vrot.slane %v609, 4
          %v611 = vmax.f32 %v609, %v610
          %v612 = vrot.slane %v611, 2
          %v613 = vmax.f32 %v611, %v612
          %v614 = vrot.slane %v613, 1
          %v615 = vmax.f32 %v613, %v614
          %vm616 = vcmp.eq.s32.totalorder %v459, 0
          %v617 = vsel %vm616, 1, 0
          %vm618 = vcmp.eq.s32.totalorder %v617, 1
          %v619 = vsel %vm618, %v594, -inf
          %v620 = vsel %vm618, %v615, -inf
          %v621 = vmax.f32 %v460, %v619
          %v622 = vmax.f32 %v461, %v620
          %623 = vset.pattern.permute.xlu0 1
          %624 = vperm.xlu0 %623, %v341
          %v625 = vpop.permute.xlu0 %624
          %627 = vset.pattern.permute.xlu0 1
          %628 = vperm.xlu0 %627, %v342
          %v629 = vpop.permute.xlu0 %628
          %631 = vset.pattern.permute.xlu0 1
          %632 = vperm.xlu0 %631, %v343
          %v633 = vpop.permute.xlu0 %632
          %635 = vset.pattern.permute.xlu0 1
          %636 = vperm.xlu0 %635, %v344
          %v637 = vpop.permute.xlu0 %636
          %639 = vset.pattern.permute.xlu0 1
          %640 = vperm.xlu0 %639, %v345
          %v641 = vpop.permute.xlu0 %640
          %643 = vset.pattern.permute.xlu0 1
          %644 = vperm.xlu0 %643, %v346
          %v645 = vpop.permute.xlu0 %644
          %647 = vset.pattern.permute.xlu0 1
          %648 = vperm.xlu0 %647, %v347
          %v649 = vpop.permute.xlu0 %648
          %651 = vset.pattern.permute.xlu0 1
          %652 = vperm.xlu0 %651, %v348
          %v653 = vpop.permute.xlu0 %652
          %655 = vset.pattern.permute.xlu0 1
          %656 = vperm.xlu0 %655, %v349
          %v657 = vpop.permute.xlu0 %656
          %659 = vset.pattern.permute.xlu0 1
          %660 = vperm.xlu0 %659, %v350
          %v661 = vpop.permute.xlu0 %660
          %663 = vset.pattern.permute.xlu0 1
          %664 = vperm.xlu0 %663, %v351
          %v665 = vpop.permute.xlu0 %664
          %667 = vset.pattern.permute.xlu0 1
          %668 = vperm.xlu0 %667, %v352
          %v669 = vpop.permute.xlu0 %668
          %671 = vset.pattern.permute.xlu0 1
          %672 = vperm.xlu0 %671, %v353
          %v673 = vpop.permute.xlu0 %672
          %675 = vset.pattern.permute.xlu0 1
          %676 = vperm.xlu0 %675, %v354
          %v677 = vpop.permute.xlu0 %676
          %679 = vset.pattern.permute.xlu0 1
          %680 = vperm.xlu0 %679, %v355
          %v681 = vpop.permute.xlu0 %680
          %683 = vset.pattern.permute.xlu0 1
          %684 = vperm.xlu0 %683, %v356
          %v685 = vpop.permute.xlu0 %684
          %v687 = vsel %vm426, %v625, -inf
          %v688 = vsel %vm427, %v625, -inf
          %v689 = vsel %vm428, %v629, -inf
          %v690 = vsel %vm429, %v629, -inf
          %v691 = vsel %vm430, %v633, -inf
          %v692 = vsel %vm431, %v633, -inf
          %v693 = vsel %vm432, %v637, -inf
          %v694 = vsel %vm433, %v637, -inf
          %v695 = vsel %vm434, %v641, -inf
          %v696 = vsel %vm435, %v641, -inf
          %v697 = vsel %vm436, %v645, -inf
          %v698 = vsel %vm437, %v645, -inf
          %v699 = vsel %vm438, %v649, -inf
          %v700 = vsel %vm439, %v649, -inf
          %v701 = vsel %vm440, %v653, -inf
          %v702 = vsel %vm441, %v653, -inf
          %v703 = vsel %vm442, %v657, -inf
          %v704 = vsel %vm443, %v657, -inf
          %v705 = vsel %vm444, %v661, -inf
          %v706 = vsel %vm445, %v661, -inf
          %v707 = vsel %vm446, %v665, -inf
          %v708 = vsel %vm447, %v665, -inf
          %v709 = vsel %vm448, %v669, -inf
          %v710 = vsel %vm449, %v669, -inf
          %v711 = vsel %vm450, %v673, -inf
          %v712 = vsel %vm451, %v673, -inf
          %v713 = vsel %vm452, %v677, -inf
          %v714 = vsel %vm453, %v677, -inf
          %v715 = vsel %vm454, %v681, -inf
          %v716 = vsel %vm455, %v681, -inf
          %v717 = vsel %vm456, %v685, -inf
          %v718 = vsel %vm457, %v685, -inf
          %v719 = vmax.f32 %v687, %v691
          %v720 = vmax.f32 %v689, %v693
          %v721 = vmax.f32 %v719, %v695
          %v722 = vmax.f32 %v720, %v697
          %v723 = vmax.f32 %v721, %v699
          %v724 = vmax.f32 %v722, %v701
          %v725 = vmax.f32 %v723, %v703
          %v726 = vmax.f32 %v724, %v705
          %v727 = vmax.f32 %v725, %v707
          %v728 = vmax.f32 %v726, %v709
          %v729 = vmax.f32 %v727, %v711
          %v730 = vmax.f32 %v728, %v713
          %v731 = vmax.f32 %v729, %v715
          %v732 = vmax.f32 %v730, %v717
          %v733 = vmax.f32 %v731, %v732
          %v734 = vrot.slane %v733, 4
          %v735 = vmax.f32 %v733, %v734
          %v736 = vrot.slane %v735, 2
          %v737 = vmax.f32 %v735, %v736
          %v738 = vrot.slane %v737, 1
          %v739 = vmax.f32 %v737, %v738
          %v740 = vmax.f32 %v688, %v692
          %v741 = vmax.f32 %v690, %v694
          %v742 = vmax.f32 %v740, %v696
          %v743 = vmax.f32 %v741, %v698
          %v744 = vmax.f32 %v742, %v700
          %v745 = vmax.f32 %v743, %v702
          %v746 = vmax.f32 %v744, %v704
          %v747 = vmax.f32 %v745, %v706
          %v748 = vmax.f32 %v746, %v708
          %v749 = vmax.f32 %v747, %v710
          %v750 = vmax.f32 %v748, %v712
          %v751 = vmax.f32 %v749, %v714
          %v752 = vmax.f32 %v750, %v716
          %v753 = vmax.f32 %v751, %v718
          %v754 = vmax.f32 %v752, %v753
          %v755 = vrot.slane %v754, 4
          %v756 = vmax.f32 %v754, %v755
          %v757 = vrot.slane %v756, 2
          %v758 = vmax.f32 %v756, %v757
          %v759 = vrot.slane %v758, 1
          %v760 = vmax.f32 %v758, %v759
          %vm761 = vcmp.eq.s32.totalorder %v459, 1
          %v762 = vsel %vm761, 1, 0
          %vm763 = vcmp.eq.s32.totalorder %v762, 1
          %v764 = vsel %vm763, %v739, -inf
          %v765 = vsel %vm763, %v760, -inf
          %v766 = vmax.f32 %v621, %v764
          %v767 = vmax.f32 %v622, %v765
          %768 = vset.pattern.permute.xlu0 2
          %769 = vperm.xlu0 %768, %v341
          %v770 = vpop.permute.xlu0 %769
          %772 = vset.pattern.permute.xlu0 2
          %773 = vperm.xlu0 %772, %v342
          %v774 = vpop.permute.xlu0 %773
          %776 = vset.pattern.permute.xlu0 2
          %777 = vperm.xlu0 %776, %v343
          %v778 = vpop.permute.xlu0 %777
          %780 = vset.pattern.permute.xlu0 2
          %781 = vperm.xlu0 %780, %v344
          %v782 = vpop.permute.xlu0 %781
          %784 = vset.pattern.permute.xlu0 2
          %785 = vperm.xlu0 %784, %v345
          %v786 = vpop.permute.xlu0 %785
          %788 = vset.pattern.permute.xlu0 2
          %789 = vperm.xlu0 %788, %v346
          %v790 = vpop.permute.xlu0 %789
          %792 = vset.pattern.permute.xlu0 2
          %793 = vperm.xlu0 %792, %v347
          %v794 = vpop.permute.xlu0 %793
          %796 = vset.pattern.permute.xlu0 2
          %797 = vperm.xlu0 %796, %v348
          %v798 = vpop.permute.xlu0 %797
          %800 = vset.pattern.permute.xlu0 2
          %801 = vperm.xlu0 %800, %v349
          %v802 = vpop.permute.xlu0 %801
          %804 = vset.pattern.permute.xlu0 2
          %805 = vperm.xlu0 %804, %v350
          %v806 = vpop.permute.xlu0 %805
          %808 = vset.pattern.permute.xlu0 2
          %809 = vperm.xlu0 %808, %v351
          %v810 = vpop.permute.xlu0 %809
          %812 = vset.pattern.permute.xlu0 2
          %813 = vperm.xlu0 %812, %v352
          %v814 = vpop.permute.xlu0 %813
          %816 = vset.pattern.permute.xlu0 2
          %817 = vperm.xlu0 %816, %v353
          %v818 = vpop.permute.xlu0 %817
          %820 = vset.pattern.permute.xlu0 2
          %821 = vperm.xlu0 %820, %v354
          %v822 = vpop.permute.xlu0 %821
          %824 = vset.pattern.permute.xlu0 2
          %825 = vperm.xlu0 %824, %v355
          %v826 = vpop.permute.xlu0 %825
          %828 = vset.pattern.permute.xlu0 2
          %829 = vperm.xlu0 %828, %v356
          %v830 = vpop.permute.xlu0 %829
          %v832 = vsel %vm426, %v770, -inf
          %v833 = vsel %vm427, %v770, -inf
          %v834 = vsel %vm428, %v774, -inf
          %v835 = vsel %vm429, %v774, -inf
          %v836 = vsel %vm430, %v778, -inf
          %v837 = vsel %vm431, %v778, -inf
          %v838 = vsel %vm432, %v782, -inf
          %v839 = vsel %vm433, %v782, -inf
          %v840 = vsel %vm434, %v786, -inf
          %v841 = vsel %vm435, %v786, -inf
          %v842 = vsel %vm436, %v790, -inf
          %v843 = vsel %vm437, %v790, -inf
          %v844 = vsel %vm438, %v794, -inf
          %v845 = vsel %vm439, %v794, -inf
          %v846 = vsel %vm440, %v798, -inf
          %v847 = vsel %vm441, %v798, -inf
          %v848 = vsel %vm442, %v802, -inf
          %v849 = vsel %vm443, %v802, -inf
          %v850 = vsel %vm444, %v806, -inf
          %v851 = vsel %vm445, %v806, -inf
          %v852 = vsel %vm446, %v810, -inf
          %v853 = vsel %vm447, %v810, -inf
          %v854 = vsel %vm448, %v814, -inf
          %v855 = vsel %vm449, %v814, -inf
          %v856 = vsel %vm450, %v818, -inf
          %v857 = vsel %vm451, %v818, -inf
          %v858 = vsel %vm452, %v822, -inf
          %v859 = vsel %vm453, %v822, -inf
          %v860 = vsel %vm454, %v826, -inf
          %v861 = vsel %vm455, %v826, -inf
          %v862 = vsel %vm456, %v830, -inf
          %v863 = vsel %vm457, %v830, -inf
          %v864 = vmax.f32 %v832, %v836
          %v865 = vmax.f32 %v834, %v838
          %v866 = vmax.f32 %v864, %v840
          %v867 = vmax.f32 %v865, %v842
          %v868 = vmax.f32 %v866, %v844
          %v869 = vmax.f32 %v867, %v846
          %v870 = vmax.f32 %v868, %v848
          %v871 = vmax.f32 %v869, %v850
          %v872 = vmax.f32 %v870, %v852
          %v873 = vmax.f32 %v871, %v854
          %v874 = vmax.f32 %v872, %v856
          %v875 = vmax.f32 %v873, %v858
          %v876 = vmax.f32 %v874, %v860
          %v877 = vmax.f32 %v875, %v862
          %v878 = vmax.f32 %v876, %v877
          %v879 = vrot.slane %v878, 4
          %v880 = vmax.f32 %v878, %v879
          %v881 = vrot.slane %v880, 2
          %v882 = vmax.f32 %v880, %v881
          %v883 = vrot.slane %v882, 1
          %v884 = vmax.f32 %v882, %v883
          %v885 = vmax.f32 %v833, %v837
          %v886 = vmax.f32 %v835, %v839
          %v887 = vmax.f32 %v885, %v841
          %v888 = vmax.f32 %v886, %v843
          %v889 = vmax.f32 %v887, %v845
          %v890 = vmax.f32 %v888, %v847
          %v891 = vmax.f32 %v889, %v849
          %v892 = vmax.f32 %v890, %v851
          %v893 = vmax.f32 %v891, %v853
          %v894 = vmax.f32 %v892, %v855
          %v895 = vmax.f32 %v893, %v857
          %v896 = vmax.f32 %v894, %v859
          %v897 = vmax.f32 %v895, %v861
          %v898 = vmax.f32 %v896, %v863
          %v899 = vmax.f32 %v897, %v898
          %v900 = vrot.slane %v899, 4
          %v901 = vmax.f32 %v899, %v900
          %v902 = vrot.slane %v901, 2
          %v903 = vmax.f32 %v901, %v902
          %v904 = vrot.slane %v903, 1
          %v905 = vmax.f32 %v903, %v904
          %vm906 = vcmp.eq.s32.totalorder %v459, 2
          %v907 = vsel %vm906, 1, 0
          %vm908 = vcmp.eq.s32.totalorder %v907, 1
          %v909 = vsel %vm908, %v884, -inf
          %v910 = vsel %vm908, %v905, -inf
          %v911 = vmax.f32 %v766, %v909
          %v912 = vmax.f32 %v767, %v910
          %913 = vset.pattern.permute.xlu0 3
          %914 = vperm.xlu0 %913, %v341
          %v915 = vpop.permute.xlu0 %914
          %917 = vset.pattern.permute.xlu0 3
          %918 = vperm.xlu0 %917, %v342
          %v919 = vpop.permute.xlu0 %918
          %921 = vset.pattern.permute.xlu0 3
          %922 = vperm.xlu0 %921, %v343
          %v923 = vpop.permute.xlu0 %922
          %925 = vset.pattern.permute.xlu0 3
          %926 = vperm.xlu0 %925, %v344
          %v927 = vpop.permute.xlu0 %926
          %929 = vset.pattern.permute.xlu0 3
          %930 = vperm.xlu0 %929, %v345
          %v931 = vpop.permute.xlu0 %930
          %933 = vset.pattern.permute.xlu0 3
          %934 = vperm.xlu0 %933, %v346
          %v935 = vpop.permute.xlu0 %934
          %937 = vset.pattern.permute.xlu0 3
          %938 = vperm.xlu0 %937, %v347
          %v939 = vpop.permute.xlu0 %938
          %941 = vset.pattern.permute.xlu0 3
          %942 = vperm.xlu0 %941, %v348
          %v943 = vpop.permute.xlu0 %942
          %945 = vset.pattern.permute.xlu0 3
          %946 = vperm.xlu0 %945, %v349
          %v947 = vpop.permute.xlu0 %946
          %949 = vset.pattern.permute.xlu0 3
          %950 = vperm.xlu0 %949, %v350
          %v951 = vpop.permute.xlu0 %950
          %953 = vset.pattern.permute.xlu0 3
          %954 = vperm.xlu0 %953, %v351
          %v955 = vpop.permute.xlu0 %954
          %957 = vset.pattern.permute.xlu0 3
          %958 = vperm.xlu0 %957, %v352
          %v959 = vpop.permute.xlu0 %958
          %961 = vset.pattern.permute.xlu0 3
          %962 = vperm.xlu0 %961, %v353
          %v963 = vpop.permute.xlu0 %962
          %965 = vset.pattern.permute.xlu0 3
          %966 = vperm.xlu0 %965, %v354
          %v967 = vpop.permute.xlu0 %966
          %969 = vset.pattern.permute.xlu0 3
          %970 = vperm.xlu0 %969, %v355
          %v971 = vpop.permute.xlu0 %970
          %973 = vset.pattern.permute.xlu0 3
          %974 = vperm.xlu0 %973, %v356
          %v975 = vpop.permute.xlu0 %974
          %v977 = vsel %vm426, %v915, -inf
          %v978 = vsel %vm427, %v915, -inf
          %v979 = vsel %vm428, %v919, -inf
          %v980 = vsel %vm429, %v919, -inf
          %v981 = vsel %vm430, %v923, -inf
          %v982 = vsel %vm431, %v923, -inf
          %v983 = vsel %vm432, %v927, -inf
          %v984 = vsel %vm433, %v927, -inf
          %v985 = vsel %vm434, %v931, -inf
          %v986 = vsel %vm435, %v931, -inf
          %v987 = vsel %vm436, %v935, -inf
          %v988 = vsel %vm437, %v935, -inf
          %v989 = vsel %vm438, %v939, -inf
          %v990 = vsel %vm439, %v939, -inf
          %v991 = vsel %vm440, %v943, -inf
          %v992 = vsel %vm441, %v943, -inf
          %v993 = vsel %vm442, %v947, -inf
          %v994 = vsel %vm443, %v947, -inf
          %v995 = vsel %vm444, %v951, -inf
          %v996 = vsel %vm445, %v951, -inf
          %v997 = vsel %vm446, %v955, -inf
          %v998 = vsel %vm447, %v955, -inf
          %v999 = vsel %vm448, %v959, -inf
          %v1000 = vsel %vm449, %v959, -inf
          %v1001 = vsel %vm450, %v963, -inf
          %v1002 = vsel %vm451, %v963, -inf
          %v1003 = vsel %vm452, %v967, -inf
          %v1004 = vsel %vm453, %v967, -inf
          %v1005 = vsel %vm454, %v971, -inf
          %v1006 = vsel %vm455, %v971, -inf
          %v1007 = vsel %vm456, %v975, -inf
          %v1008 = vsel %vm457, %v975, -inf
          %v1009 = vmax.f32 %v977, %v981
          %v1010 = vmax.f32 %v979, %v983
          %v1011 = vmax.f32 %v1009, %v985
          %v1012 = vmax.f32 %v1010, %v987
          %v1013 = vmax.f32 %v1011, %v989
          %v1014 = vmax.f32 %v1012, %v991
          %v1015 = vmax.f32 %v1013, %v993
          %v1016 = vmax.f32 %v1014, %v995
          %v1017 = vmax.f32 %v1015, %v997
          %v1018 = vmax.f32 %v1016, %v999
          %v1019 = vmax.f32 %v1017, %v1001
          %v1020 = vmax.f32 %v1018, %v1003
          %v1021 = vmax.f32 %v1019, %v1005
          %v1022 = vmax.f32 %v1020, %v1007
          %v1023 = vmax.f32 %v1021, %v1022
          %v1024 = vrot.slane %v1023, 4
          %v1025 = vmax.f32 %v1023, %v1024
          %v1026 = vrot.slane %v1025, 2
          %v1027 = vmax.f32 %v1025, %v1026
          %v1028 = vrot.slane %v1027, 1
          %v1029 = vmax.f32 %v1027, %v1028
          %v1030 = vmax.f32 %v978, %v982
          %v1031 = vmax.f32 %v980, %v984
          %v1032 = vmax.f32 %v1030, %v986
          %v1033 = vmax.f32 %v1031, %v988
          %v1034 = vmax.f32 %v1032, %v990
          %v1035 = vmax.f32 %v1033, %v992
          %v1036 = vmax.f32 %v1034, %v994
          %v1037 = vmax.f32 %v1035, %v996
          %v1038 = vmax.f32 %v1036, %v998
          %v1039 = vmax.f32 %v1037, %v1000
          %v1040 = vmax.f32 %v1038, %v1002
          %v1041 = vmax.f32 %v1039, %v1004
          %v1042 = vmax.f32 %v1040, %v1006
          %v1043 = vmax.f32 %v1041, %v1008
          %v1044 = vmax.f32 %v1042, %v1043
          %v1045 = vrot.slane %v1044, 4
          %v1046 = vmax.f32 %v1044, %v1045
          %v1047 = vrot.slane %v1046, 2
          %v1048 = vmax.f32 %v1046, %v1047
          %v1049 = vrot.slane %v1048, 1
          %v1050 = vmax.f32 %v1048, %v1049
          %vm1051 = vcmp.eq.s32.totalorder %v459, 3
          %v1052 = vsel %vm1051, 1, 0
          %vm1053 = vcmp.eq.s32.totalorder %v1052, 1
          %v1054 = vsel %vm1053, %v1029, -inf
          %v1055 = vsel %vm1053, %v1050, -inf
          %v1056 = vmax.f32 %v911, %v1054
          %v1057 = vmax.f32 %v912, %v1055
          %1058 = vset.pattern.permute.xlu0 4
          %1059 = vperm.xlu0 %1058, %v341
          %v1060 = vpop.permute.xlu0 %1059
          %1062 = vset.pattern.permute.xlu0 4
          %1063 = vperm.xlu0 %1062, %v342
          %v1064 = vpop.permute.xlu0 %1063
          %1066 = vset.pattern.permute.xlu0 4
          %1067 = vperm.xlu0 %1066, %v343
          %v1068 = vpop.permute.xlu0 %1067
          %1070 = vset.pattern.permute.xlu0 4
          %1071 = vperm.xlu0 %1070, %v344
          %v1072 = vpop.permute.xlu0 %1071
          %1074 = vset.pattern.permute.xlu0 4
          %1075 = vperm.xlu0 %1074, %v345
          %v1076 = vpop.permute.xlu0 %1075
          %1078 = vset.pattern.permute.xlu0 4
          %1079 = vperm.xlu0 %1078, %v346
          %v1080 = vpop.permute.xlu0 %1079
          %1082 = vset.pattern.permute.xlu0 4
          %1083 = vperm.xlu0 %1082, %v347
          %v1084 = vpop.permute.xlu0 %1083
          %1086 = vset.pattern.permute.xlu0 4
          %1087 = vperm.xlu0 %1086, %v348
          %v1088 = vpop.permute.xlu0 %1087
          %1090 = vset.pattern.permute.xlu0 4
          %1091 = vperm.xlu0 %1090, %v349
          %v1092 = vpop.permute.xlu0 %1091
          %1094 = vset.pattern.permute.xlu0 4
          %1095 = vperm.xlu0 %1094, %v350
          %v1096 = vpop.permute.xlu0 %1095
          %1098 = vset.pattern.permute.xlu0 4
          %1099 = vperm.xlu0 %1098, %v351
          %v1100 = vpop.permute.xlu0 %1099
          %1102 = vset.pattern.permute.xlu0 4
          %1103 = vperm.xlu0 %1102, %v352
          %v1104 = vpop.permute.xlu0 %1103
          %1106 = vset.pattern.permute.xlu0 4
          %1107 = vperm.xlu0 %1106, %v353
          %v1108 = vpop.permute.xlu0 %1107
          %1110 = vset.pattern.permute.xlu0 4
          %1111 = vperm.xlu0 %1110, %v354
          %v1112 = vpop.permute.xlu0 %1111
          %1114 = vset.pattern.permute.xlu0 4
          %1115 = vperm.xlu0 %1114, %v355
          %v1116 = vpop.permute.xlu0 %1115
          %1118 = vset.pattern.permute.xlu0 4
          %1119 = vperm.xlu0 %1118, %v356
          %v1120 = vpop.permute.xlu0 %1119
          %v1122 = vsel %vm426, %v1060, -inf
          %v1123 = vsel %vm427, %v1060, -inf
          %v1124 = vsel %vm428, %v1064, -inf
          %v1125 = vsel %vm429, %v1064, -inf
          %v1126 = vsel %vm430, %v1068, -inf
          %v1127 = vsel %vm431, %v1068, -inf
          %v1128 = vsel %vm432, %v1072, -inf
          %v1129 = vsel %vm433, %v1072, -inf
          %v1130 = vsel %vm434, %v1076, -inf
          %v1131 = vsel %vm435, %v1076, -inf
          %v1132 = vsel %vm436, %v1080, -inf
          %v1133 = vsel %vm437, %v1080, -inf
          %v1134 = vsel %vm438, %v1084, -inf
          %v1135 = vsel %vm439, %v1084, -inf
          %v1136 = vsel %vm440, %v1088, -inf
          %v1137 = vsel %vm441, %v1088, -inf
          %v1138 = vsel %vm442, %v1092, -inf
          %v1139 = vsel %vm443, %v1092, -inf
          %v1140 = vsel %vm444, %v1096, -inf
          %v1141 = vsel %vm445, %v1096, -inf
          %v1142 = vsel %vm446, %v1100, -inf
          %v1143 = vsel %vm447, %v1100, -inf
          %v1144 = vsel %vm448, %v1104, -inf
          %v1145 = vsel %vm449, %v1104, -inf
          %v1146 = vsel %vm450, %v1108, -inf
          %v1147 = vsel %vm451, %v1108, -inf
          %v1148 = vsel %vm452, %v1112, -inf
          %v1149 = vsel %vm453, %v1112, -inf
          %v1150 = vsel %vm454, %v1116, -inf
          %v1151 = vsel %vm455, %v1116, -inf
          %v1152 = vsel %vm456, %v1120, -inf
          %v1153 = vsel %vm457, %v1120, -inf
          %v1154 = vmax.f32 %v1122, %v1126
          %v1155 = vmax.f32 %v1124, %v1128
          %v1156 = vmax.f32 %v1154, %v1130
          %v1157 = vmax.f32 %v1155, %v1132
          %v1158 = vmax.f32 %v1156, %v1134
          %v1159 = vmax.f32 %v1157, %v1136
          %v1160 = vmax.f32 %v1158, %v1138
          %v1161 = vmax.f32 %v1159, %v1140
          %v1162 = vmax.f32 %v1160, %v1142
          %v1163 = vmax.f32 %v1161, %v1144
          %v1164 = vmax.f32 %v1162, %v1146
          %v1165 = vmax.f32 %v1163, %v1148
          %v1166 = vmax.f32 %v1164, %v1150
          %v1167 = vmax.f32 %v1165, %v1152
          %v1168 = vmax.f32 %v1166, %v1167
          %v1169 = vrot.slane %v1168, 4
          %v1170 = vmax.f32 %v1168, %v1169
          %v1171 = vrot.slane %v1170, 2
          %v1172 = vmax.f32 %v1170, %v1171
          %v1173 = vrot.slane %v1172, 1
          %v1174 = vmax.f32 %v1172, %v1173
          %v1175 = vmax.f32 %v1123, %v1127
          %v1176 = vmax.f32 %v1125, %v1129
          %v1177 = vmax.f32 %v1175, %v1131
          %v1178 = vmax.f32 %v1176, %v1133
          %v1179 = vmax.f32 %v1177, %v1135
          %v1180 = vmax.f32 %v1178, %v1137
          %v1181 = vmax.f32 %v1179, %v1139
          %v1182 = vmax.f32 %v1180, %v1141
          %v1183 = vmax.f32 %v1181, %v1143
          %v1184 = vmax.f32 %v1182, %v1145
          %v1185 = vmax.f32 %v1183, %v1147
          %v1186 = vmax.f32 %v1184, %v1149
          %v1187 = vmax.f32 %v1185, %v1151
          %v1188 = vmax.f32 %v1186, %v1153
          %v1189 = vmax.f32 %v1187, %v1188
          %v1190 = vrot.slane %v1189, 4
          %v1191 = vmax.f32 %v1189, %v1190
          %v1192 = vrot.slane %v1191, 2
          %v1193 = vmax.f32 %v1191, %v1192
          %v1194 = vrot.slane %v1193, 1
          %v1195 = vmax.f32 %v1193, %v1194
          %vm1196 = vcmp.eq.s32.totalorder %v459, 4
          %v1197 = vsel %vm1196, 1, 0
          %vm1198 = vcmp.eq.s32.totalorder %v1197, 1
          %v1199 = vsel %vm1198, %v1174, -inf
          %v1200 = vsel %vm1198, %v1195, -inf
          %v1201 = vmax.f32 %v1056, %v1199
          %v1202 = vmax.f32 %v1057, %v1200
          %1203 = vset.pattern.permute.xlu0 5
          %1204 = vperm.xlu0 %1203, %v341
          %v1205 = vpop.permute.xlu0 %1204
          %1207 = vset.pattern.permute.xlu0 5
          %1208 = vperm.xlu0 %1207, %v342
          %v1209 = vpop.permute.xlu0 %1208
          %1211 = vset.pattern.permute.xlu0 5
          %1212 = vperm.xlu0 %1211, %v343
          %v1213 = vpop.permute.xlu0 %1212
          %1215 = vset.pattern.permute.xlu0 5
          %1216 = vperm.xlu0 %1215, %v344
          %v1217 = vpop.permute.xlu0 %1216
          %1219 = vset.pattern.permute.xlu0 5
          %1220 = vperm.xlu0 %1219, %v345
          %v1221 = vpop.permute.xlu0 %1220
          %1223 = vset.pattern.permute.xlu0 5
          %1224 = vperm.xlu0 %1223, %v346
          %v1225 = vpop.permute.xlu0 %1224
          %1227 = vset.pattern.permute.xlu0 5
          %1228 = vperm.xlu0 %1227, %v347
          %v1229 = vpop.permute.xlu0 %1228
          %1231 = vset.pattern.permute.xlu0 5
          %1232 = vperm.xlu0 %1231, %v348
          %v1233 = vpop.permute.xlu0 %1232
          %1235 = vset.pattern.permute.xlu0 5
          %1236 = vperm.xlu0 %1235, %v349
          %v1237 = vpop.permute.xlu0 %1236
          %1239 = vset.pattern.permute.xlu0 5
          %1240 = vperm.xlu0 %1239, %v350
          %v1241 = vpop.permute.xlu0 %1240
          %1243 = vset.pattern.permute.xlu0 5
          %1244 = vperm.xlu0 %1243, %v351
          %v1245 = vpop.permute.xlu0 %1244
          %1247 = vset.pattern.permute.xlu0 5
          %1248 = vperm.xlu0 %1247, %v352
          %v1249 = vpop.permute.xlu0 %1248
          %1251 = vset.pattern.permute.xlu0 5
          %1252 = vperm.xlu0 %1251, %v353
          %v1253 = vpop.permute.xlu0 %1252
          %1255 = vset.pattern.permute.xlu0 5
          %1256 = vperm.xlu0 %1255, %v354
          %v1257 = vpop.permute.xlu0 %1256
          %1259 = vset.pattern.permute.xlu0 5
          %1260 = vperm.xlu0 %1259, %v355
          %v1261 = vpop.permute.xlu0 %1260
          %1263 = vset.pattern.permute.xlu0 5
          %1264 = vperm.xlu0 %1263, %v356
          %v1265 = vpop.permute.xlu0 %1264
          %v1267 = vsel %vm426, %v1205, -inf
          %v1268 = vsel %vm427, %v1205, -inf
          %v1269 = vsel %vm428, %v1209, -inf
          %v1270 = vsel %vm429, %v1209, -inf
          %v1271 = vsel %vm430, %v1213, -inf
          %v1272 = vsel %vm431, %v1213, -inf
          %v1273 = vsel %vm432, %v1217, -inf
          %v1274 = vsel %vm433, %v1217, -inf
          %v1275 = vsel %vm434, %v1221, -inf
          %v1276 = vsel %vm435, %v1221, -inf
          %v1277 = vsel %vm436, %v1225, -inf
          %v1278 = vsel %vm437, %v1225, -inf
          %v1279 = vsel %vm438, %v1229, -inf
          %v1280 = vsel %vm439, %v1229, -inf
          %v1281 = vsel %vm440, %v1233, -inf
          %v1282 = vsel %vm441, %v1233, -inf
          %v1283 = vsel %vm442, %v1237, -inf
          %v1284 = vsel %vm443, %v1237, -inf
          %v1285 = vsel %vm444, %v1241, -inf
          %v1286 = vsel %vm445, %v1241, -inf
          %v1287 = vsel %vm446, %v1245, -inf
          %v1288 = vsel %vm447, %v1245, -inf
          %v1289 = vsel %vm448, %v1249, -inf
          %v1290 = vsel %vm449, %v1249, -inf
          %v1291 = vsel %vm450, %v1253, -inf
          %v1292 = vsel %vm451, %v1253, -inf
          %v1293 = vsel %vm452, %v1257, -inf
          %v1294 = vsel %vm453, %v1257, -inf
          %v1295 = vsel %vm454, %v1261, -inf
          %v1296 = vsel %vm455, %v1261, -inf
          %v1297 = vsel %vm456, %v1265, -inf
          %v1298 = vsel %vm457, %v1265, -inf
          %v1299 = vmax.f32 %v1267, %v1271
          %v1300 = vmax.f32 %v1269, %v1273
          %v1301 = vmax.f32 %v1299, %v1275
          %v1302 = vmax.f32 %v1300, %v1277
          %v1303 = vmax.f32 %v1301, %v1279
          %v1304 = vmax.f32 %v1302, %v1281
          %v1305 = vmax.f32 %v1303, %v1283
          %v1306 = vmax.f32 %v1304, %v1285
          %v1307 = vmax.f32 %v1305, %v1287
          %v1308 = vmax.f32 %v1306, %v1289
          %v1309 = vmax.f32 %v1307, %v1291
          %v1310 = vmax.f32 %v1308, %v1293
          %v1311 = vmax.f32 %v1309, %v1295
          %v1312 = vmax.f32 %v1310, %v1297
          %v1313 = vmax.f32 %v1311, %v1312
          %v1314 = vrot.slane %v1313, 4
          %v1315 = vmax.f32 %v1313, %v1314
          %v1316 = vrot.slane %v1315, 2
          %v1317 = vmax.f32 %v1315, %v1316
          %v1318 = vrot.slane %v1317, 1
          %v1319 = vmax.f32 %v1317, %v1318
          %v1320 = vmax.f32 %v1268, %v1272
          %v1321 = vmax.f32 %v1270, %v1274
          %v1322 = vmax.f32 %v1320, %v1276
          %v1323 = vmax.f32 %v1321, %v1278
          %v1324 = vmax.f32 %v1322, %v1280
          %v1325 = vmax.f32 %v1323, %v1282
          %v1326 = vmax.f32 %v1324, %v1284
          %v1327 = vmax.f32 %v1325, %v1286
          %v1328 = vmax.f32 %v1326, %v1288
          %v1329 = vmax.f32 %v1327, %v1290
          %v1330 = vmax.f32 %v1328, %v1292
          %v1331 = vmax.f32 %v1329, %v1294
          %v1332 = vmax.f32 %v1330, %v1296
          %v1333 = vmax.f32 %v1331, %v1298
          %v1334 = vmax.f32 %v1332, %v1333
          %v1335 = vrot.slane %v1334, 4
          %v1336 = vmax.f32 %v1334, %v1335
          %v1337 = vrot.slane %v1336, 2
          %v1338 = vmax.f32 %v1336, %v1337
          %v1339 = vrot.slane %v1338, 1
          %v1340 = vmax.f32 %v1338, %v1339
          %vm1341 = vcmp.eq.s32.totalorder %v459, 5
          %v1342 = vsel %vm1341, 1, 0
          %vm1343 = vcmp.eq.s32.totalorder %v1342, 1
          %v1344 = vsel %vm1343, %v1319, -inf
          %v1345 = vsel %vm1343, %v1340, -inf
          %v1346 = vmax.f32 %v1201, %v1344
          %v1347 = vmax.f32 %v1202, %v1345
          %1348 = vset.pattern.permute.xlu0 6
          %1349 = vperm.xlu0 %1348, %v341
          %v1350 = vpop.permute.xlu0 %1349
          %1352 = vset.pattern.permute.xlu0 6
          %1353 = vperm.xlu0 %1352, %v342
          %v1354 = vpop.permute.xlu0 %1353
          %1356 = vset.pattern.permute.xlu0 6
          %1357 = vperm.xlu0 %1356, %v343
          %v1358 = vpop.permute.xlu0 %1357
          %1360 = vset.pattern.permute.xlu0 6
          %1361 = vperm.xlu0 %1360, %v344
          %v1362 = vpop.permute.xlu0 %1361
          %1364 = vset.pattern.permute.xlu0 6
          %1365 = vperm.xlu0 %1364, %v345
          %v1366 = vpop.permute.xlu0 %1365
          %1368 = vset.pattern.permute.xlu0 6
          %1369 = vperm.xlu0 %1368, %v346
          %v1370 = vpop.permute.xlu0 %1369
          %1372 = vset.pattern.permute.xlu0 6
          %1373 = vperm.xlu0 %1372, %v347
          %v1374 = vpop.permute.xlu0 %1373
          %1376 = vset.pattern.permute.xlu0 6
          %1377 = vperm.xlu0 %1376, %v348
          %v1378 = vpop.permute.xlu0 %1377
          %1380 = vset.pattern.permute.xlu0 6
          %1381 = vperm.xlu0 %1380, %v349
          %v1382 = vpop.permute.xlu0 %1381
          %1384 = vset.pattern.permute.xlu0 6
          %1385 = vperm.xlu0 %1384, %v350
          %v1386 = vpop.permute.xlu0 %1385
          %1388 = vset.pattern.permute.xlu0 6
          %1389 = vperm.xlu0 %1388, %v351
          %v1390 = vpop.permute.xlu0 %1389
          %1392 = vset.pattern.permute.xlu0 6
          %1393 = vperm.xlu0 %1392, %v352
          %v1394 = vpop.permute.xlu0 %1393
          %1396 = vset.pattern.permute.xlu0 6
          %1397 = vperm.xlu0 %1396, %v353
          %v1398 = vpop.permute.xlu0 %1397
          %1400 = vset.pattern.permute.xlu0 6
          %1401 = vperm.xlu0 %1400, %v354
          %v1402 = vpop.permute.xlu0 %1401
          %1404 = vset.pattern.permute.xlu0 6
          %1405 = vperm.xlu0 %1404, %v355
          %v1406 = vpop.permute.xlu0 %1405
          %1408 = vset.pattern.permute.xlu0 6
          %1409 = vperm.xlu0 %1408, %v356
          %v1410 = vpop.permute.xlu0 %1409
          %v1412 = vsel %vm426, %v1350, -inf
          %v1413 = vsel %vm427, %v1350, -inf
          %v1414 = vsel %vm428, %v1354, -inf
          %v1415 = vsel %vm429, %v1354, -inf
          %v1416 = vsel %vm430, %v1358, -inf
          %v1417 = vsel %vm431, %v1358, -inf
          %v1418 = vsel %vm432, %v1362, -inf
          %v1419 = vsel %vm433, %v1362, -inf
          %v1420 = vsel %vm434, %v1366, -inf
          %v1421 = vsel %vm435, %v1366, -inf
          %v1422 = vsel %vm436, %v1370, -inf
          %v1423 = vsel %vm437, %v1370, -inf
          %v1424 = vsel %vm438, %v1374, -inf
          %v1425 = vsel %vm439, %v1374, -inf
          %v1426 = vsel %vm440, %v1378, -inf
          %v1427 = vsel %vm441, %v1378, -inf
          %v1428 = vsel %vm442, %v1382, -inf
          %v1429 = vsel %vm443, %v1382, -inf
          %v1430 = vsel %vm444, %v1386, -inf
          %v1431 = vsel %vm445, %v1386, -inf
          %v1432 = vsel %vm446, %v1390, -inf
          %v1433 = vsel %vm447, %v1390, -inf
          %v1434 = vsel %vm448, %v1394, -inf
          %v1435 = vsel %vm449, %v1394, -inf
          %v1436 = vsel %vm450, %v1398, -inf
          %v1437 = vsel %vm451, %v1398, -inf
          %v1438 = vsel %vm452, %v1402, -inf
          %v1439 = vsel %vm453, %v1402, -inf
          %v1440 = vsel %vm454, %v1406, -inf
          %v1441 = vsel %vm455, %v1406, -inf
          %v1442 = vsel %vm456, %v1410, -inf
          %v1443 = vsel %vm457, %v1410, -inf
          %v1444 = vmax.f32 %v1412, %v1416
          %v1445 = vmax.f32 %v1414, %v1418
          %v1446 = vmax.f32 %v1444, %v1420
          %v1447 = vmax.f32 %v1445, %v1422
          %v1448 = vmax.f32 %v1446, %v1424
          %v1449 = vmax.f32 %v1447, %v1426
          %v1450 = vmax.f32 %v1448, %v1428
          %v1451 = vmax.f32 %v1449, %v1430
          %v1452 = vmax.f32 %v1450, %v1432
          %v1453 = vmax.f32 %v1451, %v1434
          %v1454 = vmax.f32 %v1452, %v1436
          %v1455 = vmax.f32 %v1453, %v1438
          %v1456 = vmax.f32 %v1454, %v1440
          %v1457 = vmax.f32 %v1455, %v1442
          %v1458 = vmax.f32 %v1456, %v1457
          %v1459 = vrot.slane %v1458, 4
          %v1460 = vmax.f32 %v1458, %v1459
          %v1461 = vrot.slane %v1460, 2
          %v1462 = vmax.f32 %v1460, %v1461
          %v1463 = vrot.slane %v1462, 1
          %v1464 = vmax.f32 %v1462, %v1463
          %v1465 = vmax.f32 %v1413, %v1417
          %v1466 = vmax.f32 %v1415, %v1419
          %v1467 = vmax.f32 %v1465, %v1421
          %v1468 = vmax.f32 %v1466, %v1423
          %v1469 = vmax.f32 %v1467, %v1425
          %v1470 = vmax.f32 %v1468, %v1427
          %v1471 = vmax.f32 %v1469, %v1429
          %v1472 = vmax.f32 %v1470, %v1431
          %v1473 = vmax.f32 %v1471, %v1433
          %v1474 = vmax.f32 %v1472, %v1435
          %v1475 = vmax.f32 %v1473, %v1437
          %v1476 = vmax.f32 %v1474, %v1439
          %v1477 = vmax.f32 %v1475, %v1441
          %v1478 = vmax.f32 %v1476, %v1443
          %v1479 = vmax.f32 %v1477, %v1478
          %v1480 = vrot.slane %v1479, 4
          %v1481 = vmax.f32 %v1479, %v1480
          %v1482 = vrot.slane %v1481, 2
          %v1483 = vmax.f32 %v1481, %v1482
          %v1484 = vrot.slane %v1483, 1
          %v1485 = vmax.f32 %v1483, %v1484
          %vm1486 = vcmp.eq.s32.totalorder %v459, 6
          %v1487 = vsel %vm1486, 1, 0
          %vm1488 = vcmp.eq.s32.totalorder %v1487, 1
          %v1489 = vsel %vm1488, %v1464, -inf
          %v1490 = vsel %vm1488, %v1485, -inf
          %v1491 = vmax.f32 %v1346, %v1489
          %v1492 = vmax.f32 %v1347, %v1490
          %1493 = vset.pattern.permute.xlu0 7
          %1494 = vperm.xlu0 %1493, %v341
          %v1495 = vpop.permute.xlu0 %1494
          %1497 = vset.pattern.permute.xlu0 7
          %1498 = vperm.xlu0 %1497, %v342
          %v1499 = vpop.permute.xlu0 %1498
          %1501 = vset.pattern.permute.xlu0 7
          %1502 = vperm.xlu0 %1501, %v343
          %v1503 = vpop.permute.xlu0 %1502
          %1505 = vset.pattern.permute.xlu0 7
          %1506 = vperm.xlu0 %1505, %v344
          %v1507 = vpop.permute.xlu0 %1506
          %1509 = vset.pattern.permute.xlu0 7
          %1510 = vperm.xlu0 %1509, %v345
          %v1511 = vpop.permute.xlu0 %1510
          %1513 = vset.pattern.permute.xlu0 7
          %1514 = vperm.xlu0 %1513, %v346
          %v1515 = vpop.permute.xlu0 %1514
          %1517 = vset.pattern.permute.xlu0 7
          %1518 = vperm.xlu0 %1517, %v347
          %v1519 = vpop.permute.xlu0 %1518
          %1521 = vset.pattern.permute.xlu0 7
          %1522 = vperm.xlu0 %1521, %v348
          %v1523 = vpop.permute.xlu0 %1522
          %1525 = vset.pattern.permute.xlu0 7
          %1526 = vperm.xlu0 %1525, %v349
          %v1527 = vpop.permute.xlu0 %1526
          %1529 = vset.pattern.permute.xlu0 7
          %1530 = vperm.xlu0 %1529, %v350
          %v1531 = vpop.permute.xlu0 %1530
          %1533 = vset.pattern.permute.xlu0 7
          %1534 = vperm.xlu0 %1533, %v351
          %v1535 = vpop.permute.xlu0 %1534
          %1537 = vset.pattern.permute.xlu0 7
          %1538 = vperm.xlu0 %1537, %v352
          %v1539 = vpop.permute.xlu0 %1538
          %1541 = vset.pattern.permute.xlu0 7
          %1542 = vperm.xlu0 %1541, %v353
          %v1543 = vpop.permute.xlu0 %1542
          %1545 = vset.pattern.permute.xlu0 7
          %1546 = vperm.xlu0 %1545, %v354
          %v1547 = vpop.permute.xlu0 %1546
          %1549 = vset.pattern.permute.xlu0 7
          %1550 = vperm.xlu0 %1549, %v355
          %v1551 = vpop.permute.xlu0 %1550
          %1553 = vset.pattern.permute.xlu0 7
          %1554 = vperm.xlu0 %1553, %v356
          %v1555 = vpop.permute.xlu0 %1554
          %v1557 = vsel %vm426, %v1495, -inf
          %v1558 = vsel %vm427, %v1495, -inf
          %v1559 = vsel %vm428, %v1499, -inf
          %v1560 = vsel %vm429, %v1499, -inf
          %v1561 = vsel %vm430, %v1503, -inf
          %v1562 = vsel %vm431, %v1503, -inf
          %v1563 = vsel %vm432, %v1507, -inf
          %v1564 = vsel %vm433, %v1507, -inf
          %v1565 = vsel %vm434, %v1511, -inf
          %v1566 = vsel %vm435, %v1511, -inf
          %v1567 = vsel %vm436, %v1515, -inf
          %v1568 = vsel %vm437, %v1515, -inf
          %v1569 = vsel %vm438, %v1519, -inf
          %v1570 = vsel %vm439, %v1519, -inf
          %v1571 = vsel %vm440, %v1523, -inf
          %v1572 = vsel %vm441, %v1523, -inf
          %v1573 = vsel %vm442, %v1527, -inf
          %v1574 = vsel %vm443, %v1527, -inf
          %v1575 = vsel %vm444, %v1531, -inf
          %v1576 = vsel %vm445, %v1531, -inf
          %v1577 = vsel %vm446, %v1535, -inf
          %v1578 = vsel %vm447, %v1535, -inf
          %v1579 = vsel %vm448, %v1539, -inf
          %v1580 = vsel %vm449, %v1539, -inf
          %v1581 = vsel %vm450, %v1543, -inf
          %v1582 = vsel %vm451, %v1543, -inf
          %v1583 = vsel %vm452, %v1547, -inf
          %v1584 = vsel %vm453, %v1547, -inf
          %v1585 = vsel %vm454, %v1551, -inf
          %v1586 = vsel %vm455, %v1551, -inf
          %v1587 = vsel %vm456, %v1555, -inf
          %v1588 = vsel %vm457, %v1555, -inf
          %v1589 = vmax.f32 %v1557, %v1561
          %v1590 = vmax.f32 %v1559, %v1563
          %v1591 = vmax.f32 %v1589, %v1565
          %v1592 = vmax.f32 %v1590, %v1567
          %v1593 = vmax.f32 %v1591, %v1569
          %v1594 = vmax.f32 %v1592, %v1571
          %v1595 = vmax.f32 %v1593, %v1573
          %v1596 = vmax.f32 %v1594, %v1575
          %v1597 = vmax.f32 %v1595, %v1577
          %v1598 = vmax.f32 %v1596, %v1579
          %v1599 = vmax.f32 %v1597, %v1581
          %v1600 = vmax.f32 %v1598, %v1583
          %v1601 = vmax.f32 %v1599, %v1585
          %v1602 = vmax.f32 %v1600, %v1587
          %v1603 = vmax.f32 %v1601, %v1602
          %v1604 = vrot.slane %v1603, 4
          %v1605 = vmax.f32 %v1603, %v1604
          %v1606 = vrot.slane %v1605, 2
          %v1607 = vmax.f32 %v1605, %v1606
          %v1608 = vrot.slane %v1607, 1
          %v1609 = vmax.f32 %v1607, %v1608
          %v1610 = vmax.f32 %v1558, %v1562
          %v1611 = vmax.f32 %v1560, %v1564
          %v1612 = vmax.f32 %v1610, %v1566
          %v1613 = vmax.f32 %v1611, %v1568
          %v1614 = vmax.f32 %v1612, %v1570
          %v1615 = vmax.f32 %v1613, %v1572
          %v1616 = vmax.f32 %v1614, %v1574
          %v1617 = vmax.f32 %v1615, %v1576
          %v1618 = vmax.f32 %v1616, %v1578
          %v1619 = vmax.f32 %v1617, %v1580
          %v1620 = vmax.f32 %v1618, %v1582
          %v1621 = vmax.f32 %v1619, %v1584
          %v1622 = vmax.f32 %v1620, %v1586
          %v1623 = vmax.f32 %v1621, %v1588
          %v1624 = vmax.f32 %v1622, %v1623
          %v1625 = vrot.slane %v1624, 4
          %v1626 = vmax.f32 %v1624, %v1625
          %v1627 = vrot.slane %v1626, 2
          %v1628 = vmax.f32 %v1626, %v1627
          %v1629 = vrot.slane %v1628, 1
          %v1630 = vmax.f32 %v1628, %v1629
          %vm1631 = vcmp.eq.s32.totalorder %v459, 7
          %v1632 = vsel %vm1631, 1, 0
          %vm1633 = vcmp.eq.s32.totalorder %v1632, 1
          %v1634 = vsel %vm1633, %v1609, -inf
          %v1635 = vsel %vm1633, %v1630, -inf
          %v1636 = vmax.f32 %v1491, %v1634
          %v1637 = vmax.f32 %v1492, %v1635
          %1638 = vst [vmem:[%s266] sm:$0xff] %v1636
          %1639 = vst [vmem:[%s266 + $0x8] sm:$0xff] %v1637
        $region36: #{tpu_custom_call.1} parent=27 // pred_fallthru
          _
        %p1640 = scmp.eq.s32.totalorder %s35, 1
        // Predicated region
        $region37: #{tpu_custom_call.1} parent=27 // pred_check
          %p1641 = pneg %p1640
        $region38: #{tpu_custom_call.1} parent=27 // pred_check_branch
          %1643 = sbr.rel (%p1641) target = $region40
        $region39: #{tpu_custom_call.1} parent=27 // pred_region
          %v1644 = vld [vmem:[%s266] sm:$0xff]
          %v1645 = vld [vmem:[%s266 + $0x8] sm:$0xff]
          %vm1646 = vcmp.eq.f32.partialorder %v1644, -inf
          %vm1647 = vcmp.eq.f32.partialorder %v1645, -inf
          %v1648 = vsel %vm1646, 0.0, %v1644
          %v1649 = vsel %vm1647, 0.0, %v1645
          %1650 = vst [vmem:[%s266] sm:$0xff] %v1648
          %1651 = vst [vmem:[%s266 + $0x8] sm:$0xff] %v1649
        $region40: #{tpu_custom_call.1} parent=27 // pred_fallthru
          _
        %s1652 = sand.u32 %s137, 1
        %s1653 = scalar_lea.sflag [#allocation6], %s1652
        %s1654 = sand.u32 %s137, 1
        %s1655 = smul.addr %s1654, 16
        %s1656 = scalar_lea.vmem [#allocation5], %s1655
        // Predicated region
        $region41: #{tpu_custom_call.1} parent=27 // pred_check
          %p1657 = pneg %p147
        $region42: #{tpu_custom_call.1} parent=27 // pred_check_branch
          %1659 = sbr.rel (%p1657) target = $region44
        $region43: #{tpu_custom_call.1} parent=27 // pred_region
          %s1660 = smul.u32 2, %s34
          %s1662 = ssub.s32 256, 256
          %1663 = vsyncadd %s1653, %s1662
          %s1664 = smul.addr %s33, 4
          %s1665 = sadd.s32 %s1660, %s1664
          %s1666 = smul.addr %s1665, 128
          %s1667 = scalar_lea.hbm %s4, %s1666
          %s1669 = sshll.u32 %s1656, 4
          %s1670 = int_to_ptr.vmem [resolvable:$true] %s1669
          %1672 = dma.vmem_to_hbm [thread:$0]  %s1670, 256, %s1667, %s1653
        $region44: #{tpu_custom_call.1} parent=27 // pred_fallthru
          _
      $region28: #{tpu_custom_call.1} parent=5 // pred_fallthru
        _
      %p1673 = scmp.le.s32.totalorder 2, %s23
      // Predicated region
      $region45: #{tpu_custom_call.1} parent=5 // pred_check
        %p1674 = pneg %p1673
      $region46: #{tpu_custom_call.1} parent=5 // pred_check_branch
        %1676 = sbr.rel (%p1674) target = $region48
      $region47: #{tpu_custom_call.1} parent=5 // pred_region
        %s1677 = ssub.s32 %s23, 2
        // Predicated region
        $region49: #{tpu_custom_call.1} parent=47 // pred_check
          %p1678 = pneg %p153
        $region50: #{tpu_custom_call.1} parent=47 // pred_check_branch
          %1680 = sbr.rel (%p1678) target = $region52
        $region51: #{tpu_custom_call.1} parent=47 // pred_region
          %s1681 = sand.u32 %s138, 1
          %s1682 = scalar_lea.sflag [#allocation6], %s1681
          %s1683 = sand.u32 %s138, 1
          %s1684 = smul.addr %s1683, 16
          %s1685 = scalar_lea.vmem [#allocation5], %s1684
          %1686 = dma.done %s1682, 256
        $region52: #{tpu_custom_call.1} parent=47 // pred_fallthru
          _
      $region48: #{tpu_custom_call.1} parent=5 // pred_fallthru
        _
    $region6: #{tpu_custom_call.1} parent=1 // loop_footer
      %s27 = sadd.s32 1, %s23
    $region7: #{tpu_custom_call.1} parent=1 // loop_footer_branch
      %22 = sbr.rel target = $region3
    $region8: #{tpu_custom_call.1} parent=1 // loop_exit
      _
    %1687 = vsyncpa [#allocation6], 1
    %s1688 = scalar_lea.sflag [#allocation6], 1
    %1689 = vsyncpa %s1688, 1

</llo_original>
